<compile_context>
chip_gen: v6e
topology: v6e:2x2x1
jax: 0.10.0
libtpu: 0.0.40
codegen_flags: <defaults>
</compile_context>

<pallas_src>
import functools

import jax
import jax.numpy as jnp
from jax.experimental import pallas as pl
from jax.experimental.pallas import tpu as pltpu

EPS = 1e-6
LANE = 128


def _round_up(x, m):
    return ((x + m - 1) // m) * m


# --------------------------------------------------------------------------- #
# Kernel
# --------------------------------------------------------------------------- #
def _layer_norm_tanh(h, gamma, beta, n_true):
    """tanh(gamma*(h-mean)/(std+eps)+beta) over a lane-padded f32 tile.

    Padded lanes of h are exactly 0 (zero bf16 weight cols / zero bias),
    padded lanes of gamma/beta are 0, so padded output lanes stay exactly 0.
    Mean / std are computed over the TRUE n_true features (exact pad fix-up).
    """
    n_pad = h.shape[-1] - n_true
    inv_n = 1.0 / n_true
    mean = jnp.sum(h, axis=-1, keepdims=True) * inv_n      # pads contribute 0
    centered = h - mean
    sq = jnp.sum(centered * centered, axis=-1, keepdims=True)
    if n_pad:
        # each padded lane contributed (0 - mean)^2 == mean^2 ; remove exactly.
        sq = sq - n_pad * (mean * mean)
    var = sq * (1.0 / (n_true - 1))                         # Bessel (torch.std)
    std = jnp.sqrt(jnp.maximum(var, 0.0))
    denom = std + EPS
    # EUP approx reciprocal + one Newton refinement: f32-accurate, no VALU div.
    r = pl.reciprocal(denom, approx=True)
    r = r * (2.0 - denom * r)
    return jnp.tanh(gamma * (centered * r) + beta)


def _actor_kernel(n1_true, n2_true, action_dim,
                  x_ref,
                  w1_ref, b1_ref, g1_ref, be1_ref,
                  w2_ref, b2_ref, g2_ref, be2_ref,
                  w3_ref, b3_ref,
                  out_ref):
    # bf16 operands for the MXU; f32 accumulation + f32 LayerNorm statistics.
    x = x_ref[...].astype(jnp.bfloat16)

    # ---- Linear 1 (state_dim -> 400, padded to 512) + LayerNorm + tanh ----
    h = jnp.dot(x, w1_ref[...], preferred_element_type=jnp.float32) + b1_ref[...]
    h = _layer_norm_tanh(h, g1_ref[...], be1_ref[...], n1_true)

    # ---- Linear 2 (-> ls, padded to 128) + LayerNorm + tanh ----
    h = jnp.dot(h.astype(jnp.bfloat16), w2_ref[...],
                preferred_element_type=jnp.float32) + b2_ref[...]
    h = _layer_norm_tanh(h, g2_ref[...], be2_ref[...], n2_true)

    # ---- Output head (-> action_dim, MXU tile padded to 128) + tanh --------
    a = jnp.dot(h.astype(jnp.bfloat16), w3_ref[...],
                preferred_element_type=jnp.float32) + b3_ref[...]
    # Store only the true action lanes: unpadded output block, no 16x-padded
    # HBM writeback and no post-kernel lane slice.
    out_ref[...] = jnp.tanh(a[:, :action_dim])


# --------------------------------------------------------------------------- #
# Wrapper
# --------------------------------------------------------------------------- #
def actor_forward(state, padded_params, *, batch_tile=1024, min_grid_steps=1):
    """state: (B, state_dim) f32. padded_params: output of pad_params_for_kernel.

    On v7x pass min_grid_steps=2 (when B >= 16) so the "parallel" batch axis
    shards across both TensorCores; v5e/v6e have a single TC -> keep default.
    """
    pp = padded_params
    B, state_dim = state.shape
    n1, n2, action_dim = pp["n1"], pp["n2"], pp["action_dim"]
    l1p = pp["w1"].shape[1]
    lsp = pp["w2"].shape[1]
    act_pad = pp["w3"].shape[1]

    # Batch tile policy: few, large grid steps; minimize batch-pad waste.
    steps = max(int(min_grid_steps), pl.cdiv(B, batch_tile))
    bt = _round_up(pl.cdiv(B, steps), 8)
    Bp = steps * bt
    if Bp != B:
        state = jnp.pad(state, ((0, Bp - B), (0, 0)))

    tensors = (state,
               pp["w1"], pp["b1"], pp["g1"], pp["be1"],
               pp["w2"], pp["b2"], pp["g2"], pp["be2"],
               pp["w3"], pp["b3"])

    kernel = functools.partial(_actor_kernel, n1, n2, action_dim)

    # Cost hint so XLA can schedule/overlap this tiny latency-bound call.
    flops = 2 * Bp * (state_dim * l1p + l1p * lsp + lsp * act_pad) \
        + 10 * Bp * (l1p + lsp)
    transcendentals = Bp * (l1p + lsp + action_dim + 2)
    param_bytes = sum(int(t.size) * t.dtype.itemsize for t in tensors[1:])
    bytes_accessed = Bp * state_dim * 4 + param_bytes + Bp * action_dim * 4
    cost = pl.CostEstimate(flops=int(flops),
                           transcendentals=int(transcendentals),
                           bytes_accessed=int(bytes_accessed))

    # Explicit VMEM budget: resident params + double-buffered in/out blocks +
    # a generous allowance for the f32 LayerNorm intermediates. Capped below
    # v7x's 64 MiB physical VMEM.
    footprint = (param_bytes
                 + 2 * bt * state_dim * 4 + 2 * bt * action_dim * 4
                 + 4 * bt * (l1p + lsp + act_pad) * 4)
    vmem_limit = int(min(48 * 1024 * 1024, max(32 * 1024 * 1024, 2 * footprint)))

    out_shape = jax.ShapeDtypeStruct((Bp, action_dim), jnp.float32)
    out_spec = pl.BlockSpec((bt, action_dim), lambda i: (i, 0))

    def run(const_mode):
        # state / output advance with the grid; params use a constant block
        # index so they stay resident in VMEM across grid steps (no re-DMA).
        in_specs = [pl.BlockSpec((bt, state_dim), lambda i: (i, 0))]
        for t in tensors[1:]:
            if const_mode is None:
                in_specs.append(pl.BlockSpec(t.shape, lambda i: (0, 0)))
            else:
                in_specs.append(pl.BlockSpec(t.shape, lambda i: (0, 0),
                                             pipeline_mode=const_mode))
        return pl.pallas_call(
            kernel,
            out_shape=out_shape,
            grid=(steps,),
            in_specs=in_specs,
            out_specs=out_spec,
            compiler_params=pltpu.CompilerParams(
                dimension_semantics=("parallel",),
                vmem_limit_bytes=vmem_limit),
            cost_estimate=cost,
        )(*tensors)

    try:
        # Grid-constant params never advance: single-buffer them (saves VMEM,
        # no revisit bookkeeping).
        out = run(pl.Buffered(1))
    except Exception:  # pragma: no cover - build without Buffered(1) support
        out = run(None)

    return out if Bp == B else out[:B]


# --------------------------------------------------------------------------- #
# Params (PyTorch-like init) + one-time lane padding
# --------------------------------------------------------------------------- #
def init_actor_params(key, state_dim, ls, action_dim):
    """Unpadded f32 params; Linear init ~ U[-1/sqrt(fan_in), 1/sqrt(fan_in)]."""
    l1 = 400
    ks = jax.random.split(key, 6)

    def lin(kw, kb, fan_in, fan_out):
        bound = 1.0 / jnp.sqrt(jnp.float32(fan_in))
        w = jax.random.uniform(kw, (fan_in, fan_out), jnp.float32, -bound, bound)
        b = jax.random.uniform(kb, (1, fan_out), jnp.float32, -bound, bound)
        return w, b

    w1, b1 = lin(ks[0], ks[1], state_dim, l1)
    w2, b2 = lin(ks[2], ks[3], l1, ls)
    w3, b3 = lin(ks[4], ks[5], ls, action_dim)

    return {
        "w1": w1, "b1": b1,
        "g1": jnp.ones((1, l1), jnp.float32), "be1": jnp.zeros((1, l1), jnp.float32),
        "w2": w2, "b2": b2,
        "g2": jnp.ones((1, ls), jnp.float32), "be2": jnp.zeros((1, ls), jnp.float32),
        "w3": w3, "b3": b3,
    }


def _pad_cols(a, new_cols):
    pad = new_cols - a.shape[1]
    return a if pad == 0 else jnp.pad(a, ((0, 0), (0, pad)))


def _pad_rows(a, new_rows):
    pad = new_rows - a.shape[0]
    return a if pad == 0 else jnp.pad(a, ((0, pad), (0, 0)))


def pad_params_for_kernel(p):
    """Pad feature dims to 128-lane multiples (zeros), cast matmul weights to
    bf16 for the MXU; biases / gamma / beta and LN math stay f32."""
    l1 = p["w1"].shape[1]
    ls = p["w2"].shape[1]
    act = p["w3"].shape[1]
    l1p = _round_up(max(l1, LANE), LANE)     # 400 -> 512
    lsp = _round_up(max(ls, LANE), LANE)
    actp = _round_up(max(act, LANE), LANE)
    bf16 = jnp.bfloat16
    return {
        "w1": _pad_cols(p["w1"], l1p).astype(bf16),
        "b1": _pad_cols(p["b1"], l1p),
        "g1": _pad_cols(p["g1"], l1p), "be1": _pad_cols(p["be1"], l1p),
        "w2": _pad_cols(_pad_rows(p["w2"], l1p), lsp).astype(bf16),
        "b2": _pad_cols(p["b2"], lsp),
        "g2": _pad_cols(p["g2"], lsp), "be2": _pad_cols(p["be2"], lsp),
        "w3": _pad_cols(_pad_rows(p["w3"], lsp), actp).astype(bf16),
        "b3": _pad_cols(p["b3"], actp),
        "n1": l1, "n2": ls, "action_dim": act,
    }


# --------------------------------------------------------------------------- #
# Pure-JAX reference (unpadded). matmul_dtype=bf16 reproduces the kernel's
# operand rounding exactly (accumulation stays f32); f32 gives module math.
# --------------------------------------------------------------------------- #
def actor_reference(state, p, matmul_dtype=jnp.float32):
    def mm(x, w):
        return jnp.dot(x.astype(matmul_dtype).astype(jnp.float32),
                       w.astype(matmul_dtype).astype(jnp.float32))

    def ln(x, g, b):
        mean = jnp.mean(x, axis=-1, keepdims=True)
        std = jnp.sqrt(jnp.sum((x - mean) ** 2, axis=-1, keepdims=True)
                       / (x.shape[-1] - 1))
        return g * (x - mean) / (std + EPS) + b

    h = jnp.tanh(ln(mm(state, p["w1"]) + p["b1"], p["g1"], p["be1"]))
    h = jnp.tanh(ln(mm(h, p["w2"]) + p["b2"], p["g2"], p["be2"]))
    return jnp.tanh(mm(h, p["w3"]) + p["b3"])


# --------------------------------------------------------------------------- #
if __name__ == "__main__":
    # Module-consistent small shapes: state_dim=16, ls=32, action_dim=8.
    B, STATE_DIM, LS, ACTION_DIM = 8, 16, 32, 8

    key = jax.random.PRNGKey(0)
    k_param, k_s1, k_s2 = jax.random.split(key, 3)

    raw_params = init_actor_params(k_param, STATE_DIM, LS, ACTION_DIM)
    padded_params = pad_params_for_kernel(raw_params)

    def check(state, **fwd_kwargs):
        act = jax.block_until_ready(actor_forward(state, padded_params, **fwd_kwargs))
        assert act.shape == (state.shape[0], ACTION_DIM)
        # Tight check vs. a reference using the same bf16 operand rounding.
        ref_bf16 = actor_reference(state, raw_params, jnp.bfloat16)
        assert jnp.allclose(act, ref_bf16, atol=1e-2, rtol=0.0), (
            "mismatch vs bf16-operand reference: "
            f"{float(jnp.max(jnp.abs(act - ref_bf16)))}")
        # Loose sanity check vs. the original f32 module math.
        ref_f32 = actor_reference(state, raw_params)
        assert jnp.allclose(act, ref_f32, atol=1e-1, rtol=0.0), (
            f"drift vs f32 reference: {float(jnp.max(jnp.abs(act - ref_f32)))}")
        return act

    # Small batch, single grid step.
    state = jax.random.normal(k_s1, (B, STATE_DIM), jnp.float32)
    check(state)

    # Larger, non-8-multiple batch: batch padding + resident weights.
    state2 = jax.random.normal(k_s2, (300, STATE_DIM), jnp.float32)
    check(state2)

    # Multi-step grid (forced small tile) and the v7x-style >=2-tile policy.
    check(state2, batch_tile=128)
    check(state2, min_grid_steps=2)

    print("KERNEL_OK")
</pallas_src>

<mosaic_0001>
module attributes {stable_mosaic.version = 11 : i64} {
  func.func @_actor_kernel(%arg0: i32, %arg1: memref<8x16xf32, #tpu.memory_space<vmem>>, %arg2: memref<16x512xbf16, #tpu.memory_space<vmem>>, %arg3: memref<1x512xf32, #tpu.memory_space<vmem>>, %arg4: memref<1x512xf32, #tpu.memory_space<vmem>>, %arg5: memref<1x512xf32, #tpu.memory_space<vmem>>, %arg6: memref<512x128xbf16, #tpu.memory_space<vmem>>, %arg7: memref<1x128xf32, #tpu.memory_space<vmem>>, %arg8: memref<1x128xf32, #tpu.memory_space<vmem>>, %arg9: memref<1x128xf32, #tpu.memory_space<vmem>>, %arg10: memref<128x128xbf16, #tpu.memory_space<vmem>>, %arg11: memref<1x128xf32, #tpu.memory_space<vmem>>, %arg12: memref<8x8xf32, #tpu.memory_space<vmem>>) attributes {dimension_semantics = [#tpu.dimension_semantics<parallel>], iteration_bounds = array<i64: 1>, scalar_prefetch = 0 : i64, scratch_operands = 0 : i64, tpu.core_type = #tpu.core_type<tc>, window_params = [{transform_indices = @transform_0, window_bounds = array<i64: 8, 16>}, {pipeline_mode = #tpu.pipeline_mode<synchronous>, transform_indices = @transform_1, window_bounds = array<i64: 16, 512>}, {pipeline_mode = #tpu.pipeline_mode<synchronous>, transform_indices = @transform_2, window_bounds = array<i64: 1, 512>}, {pipeline_mode = #tpu.pipeline_mode<synchronous>, transform_indices = @transform_3, window_bounds = array<i64: 1, 512>}, {pipeline_mode = #tpu.pipeline_mode<synchronous>, transform_indices = @transform_4, window_bounds = array<i64: 1, 512>}, {pipeline_mode = #tpu.pipeline_mode<synchronous>, transform_indices = @transform_5, window_bounds = array<i64: 512, 128>}, {pipeline_mode = #tpu.pipeline_mode<synchronous>, transform_indices = @transform_6, window_bounds = array<i64: 1, 128>}, {pipeline_mode = #tpu.pipeline_mode<synchronous>, transform_indices = @transform_7, window_bounds = array<i64: 1, 128>}, {pipeline_mode = #tpu.pipeline_mode<synchronous>, transform_indices = @transform_8, window_bounds = array<i64: 1, 128>}, {pipeline_mode = #tpu.pipeline_mode<synchronous>, transform_indices = @transform_9, window_bounds = array<i64: 128, 128>}, {pipeline_mode = #tpu.pipeline_mode<synchronous>, transform_indices = @transform_10, window_bounds = array<i64: 1, 128>}, {transform_indices = @transform_11, window_bounds = array<i64: 8, 8>}]} {
    %c0 = arith.constant 0 : index
    %c0_0 = arith.constant 0 : index
    %0 = vector.load %arg1[%c0, %c0_0] : memref<8x16xf32, #tpu.memory_space<vmem>>, vector<8x16xf32>
    %1 = arith.truncf %0 : vector<8x16xf32> to vector<8x16xbf16>
    %c0_1 = arith.constant 0 : index
    %c0_2 = arith.constant 0 : index
    %2 = vector.load %arg2[%c0_1, %c0_2] : memref<16x512xbf16, #tpu.memory_space<vmem>>, vector<16x512xbf16>
    %cst = arith.constant dense<0.000000e+00> : vector<8x512xf32>
    %3 = tpu.matmul %1, %2, %cst {dimension_numbers = #tpu.dot_dimension_numbers<[1], [0], [0], [1], [0, 0, 1, 1], [], []>} : vector<8x16xbf16>, vector<16x512xbf16>, vector<8x512xf32> -> vector<8x512xf32>
    %c0_3 = arith.constant 0 : index
    %c0_4 = arith.constant 0 : index
    %4 = vector.load %arg3[%c0_3, %c0_4] : memref<1x512xf32, #tpu.memory_space<vmem>>, vector<1x512xf32>
    %5 = vector.broadcast %4 : vector<1x512xf32> to vector<8x512xf32>
    %6 = arith.addf %3, %5 : vector<8x512xf32>
    %c0_5 = arith.constant 0 : index
    %c0_6 = arith.constant 0 : index
    %7 = vector.load %arg4[%c0_5, %c0_6] : memref<1x512xf32, #tpu.memory_space<vmem>>, vector<1x512xf32>
    %c0_7 = arith.constant 0 : index
    %c0_8 = arith.constant 0 : index
    %8 = vector.load %arg5[%c0_7, %c0_8] : memref<1x512xf32, #tpu.memory_space<vmem>>, vector<1x512xf32>
    %cst_9 = arith.constant dense<0.000000e+00> : vector<8xf32>
    %9 = vector.multi_reduction <add>, %6, %cst_9 [1] : vector<8x512xf32> to vector<8xf32>
    %10 = vector.shape_cast %9 : vector<8xf32> to vector<8x1xf32>
    %cst_10 = arith.constant 2.500000e-03 : f32
    %11 = vector.broadcast %cst_10 : f32 to vector<8x1xf32>
    %12 = arith.mulf %10, %11 : vector<8x1xf32>
    %13 = vector.broadcast %12 : vector<8x1xf32> to vector<8x512xf32>
    %14 = arith.subf %6, %13 : vector<8x512xf32>
    %15 = arith.mulf %14, %14 : vector<8x512xf32>
    %cst_11 = arith.constant dense<0.000000e+00> : vector<8xf32>
    %16 = vector.multi_reduction <add>, %15, %cst_11 [1] : vector<8x512xf32> to vector<8xf32>
    %17 = vector.shape_cast %16 : vector<8xf32> to vector<8x1xf32>
    %18 = arith.mulf %12, %12 : vector<8x1xf32>
    %cst_12 = arith.constant 1.120000e+02 : f32
    %19 = vector.broadcast %cst_12 : f32 to vector<8x1xf32>
    %20 = arith.mulf %19, %18 : vector<8x1xf32>
    %21 = arith.subf %17, %20 : vector<8x1xf32>
    %cst_13 = arith.constant 0.00250626565 : f32
    %22 = vector.broadcast %cst_13 : f32 to vector<8x1xf32>
    %23 = arith.mulf %21, %22 : vector<8x1xf32>
    %cst_14 = arith.constant 0.000000e+00 : f32
    %24 = vector.broadcast %cst_14 : f32 to vector<8x1xf32>
    %25 = arith.maximumf %23, %24 : vector<8x1xf32>
    %26 = math.sqrt %25 : vector<8x1xf32>
    %cst_15 = arith.constant 9.99999997E-7 : f32
    %27 = vector.broadcast %cst_15 : f32 to vector<8x1xf32>
    %28 = arith.addf %26, %27 : vector<8x1xf32>
    %29 = tpu.reciprocal %28 {approx = true} : vector<8x1xf32> -> vector<8x1xf32>
    %30 = arith.mulf %28, %29 : vector<8x1xf32>
    %cst_16 = arith.constant 2.000000e+00 : f32
    %31 = vector.broadcast %cst_16 : f32 to vector<8x1xf32>
    %32 = arith.subf %31, %30 : vector<8x1xf32>
    %33 = arith.mulf %29, %32 : vector<8x1xf32>
    %34 = vector.broadcast %33 : vector<8x1xf32> to vector<8x512xf32>
    %35 = arith.mulf %14, %34 : vector<8x512xf32>
    %36 = vector.broadcast %7 : vector<1x512xf32> to vector<8x512xf32>
    %37 = arith.mulf %36, %35 : vector<8x512xf32>
    %38 = vector.broadcast %8 : vector<1x512xf32> to vector<8x512xf32>
    %39 = arith.addf %37, %38 : vector<8x512xf32>
    %40 = math.tanh %39 : vector<8x512xf32>
    %41 = arith.truncf %40 : vector<8x512xf32> to vector<8x512xbf16>
    %c0_17 = arith.constant 0 : index
    %c0_18 = arith.constant 0 : index
    %42 = vector.load %arg6[%c0_17, %c0_18] : memref<512x128xbf16, #tpu.memory_space<vmem>>, vector<512x128xbf16>
    %cst_19 = arith.constant dense<0.000000e+00> : vector<8x128xf32>
    %43 = tpu.matmul %41, %42, %cst_19 {dimension_numbers = #tpu.dot_dimension_numbers<[1], [0], [0], [1], [0, 0, 1, 1], [], []>} : vector<8x512xbf16>, vector<512x128xbf16>, vector<8x128xf32> -> vector<8x128xf32>
    %c0_20 = arith.constant 0 : index
    %c0_21 = arith.constant 0 : index
    %44 = vector.load %arg7[%c0_20, %c0_21] : memref<1x128xf32, #tpu.memory_space<vmem>>, vector<1x128xf32>
    %45 = vector.broadcast %44 : vector<1x128xf32> to vector<8x128xf32>
    %46 = arith.addf %43, %45 : vector<8x128xf32>
    %c0_22 = arith.constant 0 : index
    %c0_23 = arith.constant 0 : index
    %47 = vector.load %arg8[%c0_22, %c0_23] : memref<1x128xf32, #tpu.memory_space<vmem>>, vector<1x128xf32>
    %c0_24 = arith.constant 0 : index
    %c0_25 = arith.constant 0 : index
    %48 = vector.load %arg9[%c0_24, %c0_25] : memref<1x128xf32, #tpu.memory_space<vmem>>, vector<1x128xf32>
    %cst_26 = arith.constant dense<0.000000e+00> : vector<8xf32>
    %49 = vector.multi_reduction <add>, %46, %cst_26 [1] : vector<8x128xf32> to vector<8xf32>
    %50 = vector.shape_cast %49 : vector<8xf32> to vector<8x1xf32>
    %cst_27 = arith.constant 3.125000e-02 : f32
    %51 = vector.broadcast %cst_27 : f32 to vector<8x1xf32>
    %52 = arith.mulf %50, %51 : vector<8x1xf32>
    %53 = vector.broadcast %52 : vector<8x1xf32> to vector<8x128xf32>
    %54 = arith.subf %46, %53 : vector<8x128xf32>
    %55 = arith.mulf %54, %54 : vector<8x128xf32>
    %cst_28 = arith.constant dense<0.000000e+00> : vector<8xf32>
    %56 = vector.multi_reduction <add>, %55, %cst_28 [1] : vector<8x128xf32> to vector<8xf32>
    %57 = vector.shape_cast %56 : vector<8xf32> to vector<8x1xf32>
    %58 = arith.mulf %52, %52 : vector<8x1xf32>
    %cst_29 = arith.constant 9.600000e+01 : f32
    %59 = vector.broadcast %cst_29 : f32 to vector<8x1xf32>
    %60 = arith.mulf %59, %58 : vector<8x1xf32>
    %61 = arith.subf %57, %60 : vector<8x1xf32>
    %cst_30 = arith.constant 0.0322580636 : f32
    %62 = vector.broadcast %cst_30 : f32 to vector<8x1xf32>
    %63 = arith.mulf %61, %62 : vector<8x1xf32>
    %cst_31 = arith.constant 0.000000e+00 : f32
    %64 = vector.broadcast %cst_31 : f32 to vector<8x1xf32>
    %65 = arith.maximumf %63, %64 : vector<8x1xf32>
    %66 = math.sqrt %65 : vector<8x1xf32>
    %cst_32 = arith.constant 9.99999997E-7 : f32
    %67 = vector.broadcast %cst_32 : f32 to vector<8x1xf32>
    %68 = arith.addf %66, %67 : vector<8x1xf32>
    %69 = tpu.reciprocal %68 {approx = true} : vector<8x1xf32> -> vector<8x1xf32>
    %70 = arith.mulf %68, %69 : vector<8x1xf32>
    %cst_33 = arith.constant 2.000000e+00 : f32
    %71 = vector.broadcast %cst_33 : f32 to vector<8x1xf32>
    %72 = arith.subf %71, %70 : vector<8x1xf32>
    %73 = arith.mulf %69, %72 : vector<8x1xf32>
    %74 = vector.broadcast %73 : vector<8x1xf32> to vector<8x128xf32>
    %75 = arith.mulf %54, %74 : vector<8x128xf32>
    %76 = vector.broadcast %47 : vector<1x128xf32> to vector<8x128xf32>
    %77 = arith.mulf %76, %75 : vector<8x128xf32>
    %78 = vector.broadcast %48 : vector<1x128xf32> to vector<8x128xf32>
    %79 = arith.addf %77, %78 : vector<8x128xf32>
    %80 = math.tanh %79 : vector<8x128xf32>
    %81 = arith.truncf %80 : vector<8x128xf32> to vector<8x128xbf16>
    %c0_34 = arith.constant 0 : index
    %c0_35 = arith.constant 0 : index
    %82 = vector.load %arg10[%c0_34, %c0_35] : memref<128x128xbf16, #tpu.memory_space<vmem>>, vector<128x128xbf16>
    %cst_36 = arith.constant dense<0.000000e+00> : vector<8x128xf32>
    %83 = tpu.matmul %81, %82, %cst_36 {dimension_numbers = #tpu.dot_dimension_numbers<[1], [0], [0], [1], [0, 0, 1, 1], [], []>} : vector<8x128xbf16>, vector<128x128xbf16>, vector<8x128xf32> -> vector<8x128xf32>
    %c0_37 = arith.constant 0 : index
    %c0_38 = arith.constant 0 : index
    %84 = vector.load %arg11[%c0_37, %c0_38] : memref<1x128xf32, #tpu.memory_space<vmem>>, vector<1x128xf32>
    %85 = vector.broadcast %84 : vector<1x128xf32> to vector<8x128xf32>
    %86 = arith.addf %83, %85 : vector<8x128xf32>
    %87 = vector.extract_strided_slice %86 {offsets = [0, 0], sizes = [8, 8], strides = [1, 1]} : vector<8x128xf32> to vector<8x8xf32>
    %88 = math.tanh %87 : vector<8x8xf32>
    %c0_39 = arith.constant 0 : index
    %c0_40 = arith.constant 0 : index
    %89 = vector.load %arg12[%c0_39, %c0_40] : memref<8x8xf32, #tpu.memory_space<vmem>>, vector<8x8xf32>
    tpu.vector_store %arg12[%c0_39, %c0_40], %88 {strides = array<i32>} : memref<8x8xf32, #tpu.memory_space<vmem>>, vector<8x8xf32>,
    return
  }
  func.func @transform_0(%arg0: i32) -> (i32, i32) {
    %c0_i32 = arith.constant 0 : i32
    %c0_i32_0 = arith.constant 0 : i32
    return %arg0, %c0_i32 : i32, i32
  }
  func.func @transform_1(%arg0: i32) -> (i32, i32) {
    %c0_i32 = arith.constant 0 : i32
    %c0_i32_0 = arith.constant 0 : i32
    %c0_i32_1 = arith.constant 0 : i32
    return %c0_i32, %c0_i32_0 : i32, i32
  }
  func.func @transform_2(%arg0: i32) -> (i32, i32) {
    %c0_i32 = arith.constant 0 : i32
    %c0_i32_0 = arith.constant 0 : i32
    %c0_i32_1 = arith.constant 0 : i32
    return %c0_i32, %c0_i32_0 : i32, i32
  }
  func.func @transform_3(%arg0: i32) -> (i32, i32) {
    %c0_i32 = arith.constant 0 : i32
    %c0_i32_0 = arith.constant 0 : i32
    %c0_i32_1 = arith.constant 0 : i32
    return %c0_i32, %c0_i32_0 : i32, i32
  }
  func.func @transform_4(%arg0: i32) -> (i32, i32) {
    %c0_i32 = arith.constant 0 : i32
    %c0_i32_0 = arith.constant 0 : i32
    %c0_i32_1 = arith.constant 0 : i32
    return %c0_i32, %c0_i32_0 : i32, i32
  }
  func.func @transform_5(%arg0: i32) -> (i32, i32) {
    %c0_i32 = arith.constant 0 : i32
    %c0_i32_0 = arith.constant 0 : i32
    %c0_i32_1 = arith.constant 0 : i32
    return %c0_i32, %c0_i32_0 : i32, i32
  }
  func.func @transform_6(%arg0: i32) -> (i32, i32) {
    %c0_i32 = arith.constant 0 : i32
    %c0_i32_0 = arith.constant 0 : i32
    %c0_i32_1 = arith.constant 0 : i32
    return %c0_i32, %c0_i32_0 : i32, i32
  }
  func.func @transform_7(%arg0: i32) -> (i32, i32) {
    %c0_i32 = arith.constant 0 : i32
    %c0_i32_0 = arith.constant 0 : i32
    %c0_i32_1 = arith.constant 0 : i32
    return %c0_i32, %c0_i32_0 : i32, i32
  }
  func.func @transform_8(%arg0: i32) -> (i32, i32) {
    %c0_i32 = arith.constant 0 : i32
    %c0_i32_0 = arith.constant 0 : i32
    %c0_i32_1 = arith.constant 0 : i32
    return %c0_i32, %c0_i32_0 : i32, i32
  }
  func.func @transform_9(%arg0: i32) -> (i32, i32) {
    %c0_i32 = arith.constant 0 : i32
    %c0_i32_0 = arith.constant 0 : i32
    %c0_i32_1 = arith.constant 0 : i32
    return %c0_i32, %c0_i32_0 : i32, i32
  }
  func.func @transform_10(%arg0: i32) -> (i32, i32) {
    %c0_i32 = arith.constant 0 : i32
    %c0_i32_0 = arith.constant 0 : i32
    %c0_i32_1 = arith.constant 0 : i32
    return %c0_i32, %c0_i32_0 : i32, i32
  }
  func.func @transform_11(%arg0: i32) -> (i32, i32) {
    %c0_i32 = arith.constant 0 : i32
    %c0_i32_0 = arith.constant 0 : i32
    return %arg0, %c0_i32 : i32, i32
  }
}

module attributes {stable_mosaic.version = 11 : i64} {
  func.func @_actor_kernel(%arg0: i32, %arg1: memref<8x16xf32, #tpu.memory_space<vmem>>, %arg2: memref<16x512xbf16, #tpu.memory_space<vmem>>, %arg3: memref<1x512xf32, #tpu.memory_space<vmem>>, %arg4: memref<1x512xf32, #tpu.memory_space<vmem>>, %arg5: memref<1x512xf32, #tpu.memory_space<vmem>>, %arg6: memref<512x128xbf16, #tpu.memory_space<vmem>>, %arg7: memref<1x128xf32, #tpu.memory_space<vmem>>, %arg8: memref<1x128xf32, #tpu.memory_space<vmem>>, %arg9: memref<1x128xf32, #tpu.memory_space<vmem>>, %arg10: memref<128x128xbf16, #tpu.memory_space<vmem>>, %arg11: memref<1x128xf32, #tpu.memory_space<vmem>>, %arg12: memref<8x8xf32, #tpu.memory_space<vmem>>) attributes {dimension_semantics = [#tpu.dimension_semantics<parallel>], iteration_bounds = array<i64: 1>, scalar_prefetch = 0 : i64, scratch_operands = 0 : i64, tpu.core_type = #tpu.core_type<tc>, window_params = [{transform_indices = @transform_0, window_bounds = array<i64: 8, 16>}, {pipeline_mode = #tpu.pipeline_mode<synchronous>, transform_indices = @transform_1, window_bounds = array<i64: 16, 512>}, {pipeline_mode = #tpu.pipeline_mode<synchronous>, transform_indices = @transform_2, window_bounds = array<i64: 1, 512>}, {pipeline_mode = #tpu.pipeline_mode<synchronous>, transform_indices = @transform_3, window_bounds = array<i64: 1, 512>}, {pipeline_mode = #tpu.pipeline_mode<synchronous>, transform_indices = @transform_4, window_bounds = array<i64: 1, 512>}, {pipeline_mode = #tpu.pipeline_mode<synchronous>, transform_indices = @transform_5, window_bounds = array<i64: 512, 128>}, {pipeline_mode = #tpu.pipeline_mode<synchronous>, transform_indices = @transform_6, window_bounds = array<i64: 1, 128>}, {pipeline_mode = #tpu.pipeline_mode<synchronous>, transform_indices = @transform_7, window_bounds = array<i64: 1, 128>}, {pipeline_mode = #tpu.pipeline_mode<synchronous>, transform_indices = @transform_8, window_bounds = array<i64: 1, 128>}, {pipeline_mode = #tpu.pipeline_mode<synchronous>, transform_indices = @transform_9, window_bounds = array<i64: 128, 128>}, {pipeline_mode = #tpu.pipeline_mode<synchronous>, transform_indices = @transform_10, window_bounds = array<i64: 1, 128>}, {transform_indices = @transform_11, window_bounds = array<i64: 8, 8>}]} {
    %c0 = arith.constant 0 : index
    %c0_0 = arith.constant 0 : index
    %0 = vector.load %arg1[%c0, %c0_0] : memref<8x16xf32, #tpu.memory_space<vmem>>, vector<8x16xf32>
    %1 = arith.truncf %0 : vector<8x16xf32> to vector<8x16xbf16>
    %c0_1 = arith.constant 0 : index
    %c0_2 = arith.constant 0 : index
    %2 = vector.load %arg2[%c0_1, %c0_2] : memref<16x512xbf16, #tpu.memory_space<vmem>>, vector<16x512xbf16>
    %cst = arith.constant dense<0.000000e+00> : vector<8x512xf32>
    %3 = tpu.matmul %1, %2, %cst {dimension_numbers = #tpu.dot_dimension_numbers<[1], [0], [0], [1], [0, 0, 1, 1], [], []>} : vector<8x16xbf16>, vector<16x512xbf16>, vector<8x512xf32> -> vector<8x512xf32>
    %c0_3 = arith.constant 0 : index
    %c0_4 = arith.constant 0 : index
    %4 = vector.load %arg3[%c0_3, %c0_4] : memref<1x512xf32, #tpu.memory_space<vmem>>, vector<1x512xf32>
    %5 = vector.broadcast %4 : vector<1x512xf32> to vector<8x512xf32>
    %6 = arith.addf %3, %5 : vector<8x512xf32>
    %c0_5 = arith.constant 0 : index
    %c0_6 = arith.constant 0 : index
    %7 = vector.load %arg4[%c0_5, %c0_6] : memref<1x512xf32, #tpu.memory_space<vmem>>, vector<1x512xf32>
    %c0_7 = arith.constant 0 : index
    %c0_8 = arith.constant 0 : index
    %8 = vector.load %arg5[%c0_7, %c0_8] : memref<1x512xf32, #tpu.memory_space<vmem>>, vector<1x512xf32>
    %cst_9 = arith.constant dense<0.000000e+00> : vector<8xf32>
    %9 = vector.multi_reduction <add>, %6, %cst_9 [1] : vector<8x512xf32> to vector<8xf32>
    %10 = vector.shape_cast %9 : vector<8xf32> to vector<8x1xf32>
    %cst_10 = arith.constant 2.500000e-03 : f32
    %11 = vector.broadcast %cst_10 : f32 to vector<8x1xf32>
    %12 = arith.mulf %10, %11 : vector<8x1xf32>
    %13 = vector.broadcast %12 : vector<8x1xf32> to vector<8x512xf32>
    %14 = arith.subf %6, %13 : vector<8x512xf32>
    %15 = arith.mulf %14, %14 : vector<8x512xf32>
    %cst_11 = arith.constant dense<0.000000e+00> : vector<8xf32>
    %16 = vector.multi_reduction <add>, %15, %cst_11 [1] : vector<8x512xf32> to vector<8xf32>
    %17 = vector.shape_cast %16 : vector<8xf32> to vector<8x1xf32>
    %18 = arith.mulf %12, %12 : vector<8x1xf32>
    %cst_12 = arith.constant 1.120000e+02 : f32
    %19 = vector.broadcast %cst_12 : f32 to vector<8x1xf32>
    %20 = arith.mulf %19, %18 : vector<8x1xf32>
    %21 = arith.subf %17, %20 : vector<8x1xf32>
    %cst_13 = arith.constant 0.00250626565 : f32
    %22 = vector.broadcast %cst_13 : f32 to vector<8x1xf32>
    %23 = arith.mulf %21, %22 : vector<8x1xf32>
    %cst_14 = arith.constant 0.000000e+00 : f32
    %24 = vector.broadcast %cst_14 : f32 to vector<8x1xf32>
    %25 = arith.maximumf %23, %24 : vector<8x1xf32>
    %26 = math.sqrt %25 : vector<8x1xf32>
    %cst_15 = arith.constant 9.99999997E-7 : f32
    %27 = vector.broadcast %cst_15 : f32 to vector<8x1xf32>
    %28 = arith.addf %26, %27 : vector<8x1xf32>
    %29 = tpu.reciprocal %28 {approx = true} : vector<8x1xf32> -> vector<8x1xf32>
    %30 = arith.mulf %28, %29 : vector<8x1xf32>
    %cst_16 = arith.constant 2.000000e+00 : f32
    %31 = vector.broadcast %cst_16 : f32 to vector<8x1xf32>
    %32 = arith.subf %31, %30 : vector<8x1xf32>
    %33 = arith.mulf %29, %32 : vector<8x1xf32>
    %34 = vector.broadcast %33 : vector<8x1xf32> to vector<8x512xf32>
    %35 = arith.mulf %14, %34 : vector<8x512xf32>
    %36 = vector.broadcast %7 : vector<1x512xf32> to vector<8x512xf32>
    %37 = arith.mulf %36, %35 : vector<8x512xf32>
    %38 = vector.broadcast %8 : vector<1x512xf32> to vector<8x512xf32>
    %39 = arith.addf %37, %38 : vector<8x512xf32>
    %40 = math.tanh %39 : vector<8x512xf32>
    %41 = arith.truncf %40 : vector<8x512xf32> to vector<8x512xbf16>
    %c0_17 = arith.constant 0 : index
    %c0_18 = arith.constant 0 : index
    %42 = vector.load %arg6[%c0_17, %c0_18] : memref<512x128xbf16, #tpu.memory_space<vmem>>, vector<512x128xbf16>
    %cst_19 = arith.constant dense<0.000000e+00> : vector<8x128xf32>
    %43 = tpu.matmul %41, %42, %cst_19 {dimension_numbers = #tpu.dot_dimension_numbers<[1], [0], [0], [1], [0, 0, 1, 1], [], []>} : vector<8x512xbf16>, vector<512x128xbf16>, vector<8x128xf32> -> vector<8x128xf32>
    %c0_20 = arith.constant 0 : index
    %c0_21 = arith.constant 0 : index
    %44 = vector.load %arg7[%c0_20, %c0_21] : memref<1x128xf32, #tpu.memory_space<vmem>>, vector<1x128xf32>
    %45 = vector.broadcast %44 : vector<1x128xf32> to vector<8x128xf32>
    %46 = arith.addf %43, %45 : vector<8x128xf32>
    %c0_22 = arith.constant 0 : index
    %c0_23 = arith.constant 0 : index
    %47 = vector.load %arg8[%c0_22, %c0_23] : memref<1x128xf32, #tpu.memory_space<vmem>>, vector<1x128xf32>
    %c0_24 = arith.constant 0 : index
    %c0_25 = arith.constant 0 : index
    %48 = vector.load %arg9[%c0_24, %c0_25] : memref<1x128xf32, #tpu.memory_space<vmem>>, vector<1x128xf32>
    %cst_26 = arith.constant dense<0.000000e+00> : vector<8xf32>
    %49 = vector.multi_reduction <add>, %46, %cst_26 [1] : vector<8x128xf32> to vector<8xf32>
    %50 = vector.shape_cast %49 : vector<8xf32> to vector<8x1xf32>
    %cst_27 = arith.constant 3.125000e-02 : f32
    %51 = vector.broadcast %cst_27 : f32 to vector<8x1xf32>
    %52 = arith.mulf %50, %51 : vector<8x1xf32>
    %53 = vector.broadcast %52 : vector<8x1xf32> to vector<8x128xf32>
    %54 = arith.subf %46, %53 : vector<8x128xf32>
    %55 = arith.mulf %54, %54 : vector<8x128xf32>
    %cst_28 = arith.constant dense<0.000000e+00> : vector<8xf32>
    %56 = vector.multi_reduction <add>, %55, %cst_28 [1] : vector<8x128xf32> to vector<8xf32>
    %57 = vector.shape_cast %56 : vector<8xf32> to vector<8x1xf32>
    %58 = arith.mulf %52, %52 : vector<8x1xf32>
    %cst_29 = arith.constant 9.600000e+01 : f32
    %59 = vector.broadcast %cst_29 : f32 to vector<8x1xf32>
    %60 = arith.mulf %59, %58 : vector<8x1xf32>
    %61 = arith.subf %57, %60 : vector<8x1xf32>
    %cst_30 = arith.constant 0.0322580636 : f32
    %62 = vector.broadcast %cst_30 : f32 to vector<8x1xf32>
    %63 = arith.mulf %61, %62 : vector<8x1xf32>
    %cst_31 = arith.constant 0.000000e+00 : f32
    %64 = vector.broadcast %cst_31 : f32 to vector<8x1xf32>
    %65 = arith.maximumf %63, %64 : vector<8x1xf32>
    %66 = math.sqrt %65 : vector<8x1xf32>
    %cst_32 = arith.constant 9.99999997E-7 : f32
    %67 = vector.broadcast %cst_32 : f32 to vector<8x1xf32>
    %68 = arith.addf %66, %67 : vector<8x1xf32>
    %69 = tpu.reciprocal %68 {approx = true} : vector<8x1xf32> -> vector<8x1xf32>
    %70 = arith.mulf %68, %69 : vector<8x1xf32>
    %cst_33 = arith.constant 2.000000e+00 : f32
    %71 = vector.broadcast %cst_33 : f32 to vector<8x1xf32>
    %72 = arith.subf %71, %70 : vector<8x1xf32>
    %73 = arith.mulf %69, %72 : vector<8x1xf32>
    %74 = vector.broadcast %73 : vector<8x1xf32> to vector<8x128xf32>
    %75 = arith.mulf %54, %74 : vector<8x128xf32>
    %76 = vector.broadcast %47 : vector<1x128xf32> to vector<8x128xf32>
    %77 = arith.mulf %76, %75 : vector<8x128xf32>
    %78 = vector.broadcast %48 : vector<1x128xf32> to vector<8x128xf32>
    %79 = arith.addf %77, %78 : vector<8x128xf32>
    %80 = math.tanh %79 : vector<8x128xf32>
    %81 = arith.truncf %80 : vector<8x128xf32> to vector<8x128xbf16>
    %c0_34 = arith.constant 0 : index
    %c0_35 = arith.constant 0 : index
    %82 = vector.load %arg10[%c0_34, %c0_35] : memref<128x128xbf16, #tpu.memory_space<vmem>>, vector<128x128xbf16>
    %cst_36 = arith.constant dense<0.000000e+00> : vector<8x128xf32>
    %83 = tpu.matmul %81, %82, %cst_36 {dimension_numbers = #tpu.dot_dimension_numbers<[1], [0], [0], [1], [0, 0, 1, 1], [], []>} : vector<8x128xbf16>, vector<128x128xbf16>, vector<8x128xf32> -> vector<8x128xf32>
    %c0_37 = arith.constant 0 : index
    %c0_38 = arith.constant 0 : index
    %84 = vector.load %arg11[%c0_37, %c0_38] : memref<1x128xf32, #tpu.memory_space<vmem>>, vector<1x128xf32>
    %85 = vector.broadcast %84 : vector<1x128xf32> to vector<8x128xf32>
    %86 = arith.addf %83, %85 : vector<8x128xf32>
    %87 = vector.extract_strided_slice %86 {offsets = [0, 0], sizes = [8, 8], strides = [1, 1]} : vector<8x128xf32> to vector<8x8xf32>
    %88 = math.tanh %87 : vector<8x8xf32>
    %c0_39 = arith.constant 0 : index
    %c0_40 = arith.constant 0 : index
    %89 = vector.load %arg12[%c0_39, %c0_40] : memref<8x8xf32, #tpu.memory_space<vmem>>, vector<8x8xf32>
    tpu.vector_store %arg12[%c0_39, %c0_40], %88 {strides = array<i32>} : memref<8x8xf32, #tpu.memory_space<vmem>>, vector<8x8xf32>,
    return
  }
  func.func @transform_0(%arg0: i32) -> (i32, i32) {
    %c0_i32 = arith.constant 0 : i32
    %c0_i32_0 = arith.constant 0 : i32
    return %arg0, %c0_i32 : i32, i32
  }
  func.func @transform_1(%arg0: i32) -> (i32, i32) {
    %c0_i32 = arith.constant 0 : i32
    %c0_i32_0 = arith.constant 0 : i32
    %c0_i32_1 = arith.constant 0 : i32
    return %c0_i32, %c0_i32_0 : i32, i32
  }
  func.func @transform_2(%arg0: i32) -> (i32, i32) {
    %c0_i32 = arith.constant 0 : i32
    %c0_i32_0 = arith.constant 0 : i32
    %c0_i32_1 = arith.constant 0 : i32
    return %c0_i32, %c0_i32_0 : i32, i32
  }
  func.func @transform_3(%arg0: i32) -> (i32, i32) {
    %c0_i32 = arith.constant 0 : i32
    %c0_i32_0 = arith.constant 0 : i32
    %c0_i32_1 = arith.constant 0 : i32
    return %c0_i32, %c0_i32_0 : i32, i32
  }
  func.func @transform_4(%arg0: i32) -> (i32, i32) {
    %c0_i32 = arith.constant 0 : i32
    %c0_i32_0 = arith.constant 0 : i32
    %c0_i32_1 = arith.constant 0 : i32
    return %c0_i32, %c0_i32_0 : i32, i32
  }
  func.func @transform_5(%arg0: i32) -> (i32, i32) {
    %c0_i32 = arith.constant 0 : i32
    %c0_i32_0 = arith.constant 0 : i32
    %c0_i32_1 = arith.constant 0 : i32
    return %c0_i32, %c0_i32_0 : i32, i32
  }
  func.func @transform_6(%arg0: i32) -> (i32, i32) {
    %c0_i32 = arith.constant 0 : i32
    %c0_i32_0 = arith.constant 0 : i32
    %c0_i32_1 = arith.constant 0 : i32
    return %c0_i32, %c0_i32_0 : i32, i32
  }
  func.func @transform_7(%arg0: i32) -> (i32, i32) {
    %c0_i32 = arith.constant 0 : i32
    %c0_i32_0 = arith.constant 0 : i32
    %c0_i32_1 = arith.constant 0 : i32
    return %c0_i32, %c0_i32_0 : i32, i32
  }
  func.func @transform_8(%arg0: i32) -> (i32, i32) {
    %c0_i32 = arith.constant 0 : i32
    %c0_i32_0 = arith.constant 0 : i32
    %c0_i32_1 = arith.constant 0 : i32
    return %c0_i32, %c0_i32_0 : i32, i32
  }
  func.func @transform_9(%arg0: i32) -> (i32, i32) {
    %c0_i32 = arith.constant 0 : i32
    %c0_i32_0 = arith.constant 0 : i32
    %c0_i32_1 = arith.constant 0 : i32
    return %c0_i32, %c0_i32_0 : i32, i32
  }
  func.func @transform_10(%arg0: i32) -> (i32, i32) {
    %c0_i32 = arith.constant 0 : i32
    %c0_i32_0 = arith.constant 0 : i32
    %c0_i32_1 = arith.constant 0 : i32
    return %c0_i32, %c0_i32_0 : i32, i32
  }
  func.func @transform_11(%arg0: i32) -> (i32, i32) {
    %c0_i32 = arith.constant 0 : i32
    %c0_i32_0 = arith.constant 0 : i32
    return %arg0, %c0_i32 : i32, i32
  }
}

</mosaic_0001>

<llo_original>
// kernel: tpu_custom_call.1
$region0: #{tpu_custom_call.1}
  #allocation0 [shape = 'u32[]', space=smem, size = 0x4, offset = 0x4, fixed_abs, tag = 'smem constant byte address 0x4 - core index']
  #allocation1 [shape = 'u32[144,128]{1,0:T(1,128)}', space=vmem, size = 0x12000, scoped, tag = 'internal scratch']
  %s0 = inlined_call_operand.hbm [shape: f32[8,16], index: 0, kind: input, shape index: {}]
  %s1 = inlined_call_operand.hbm [shape: bf16[16,512], index: 1, kind: input, shape index: {}]
  %s2 = inlined_call_operand.hbm [shape: f32[1,512], index: 2, kind: input, shape index: {}]
  %s3 = inlined_call_operand.vmem [shape: f32[1,512], index: 3, kind: input, shape index: {}]
  %s4 = inlined_call_operand.hbm [shape: f32[1,512], index: 4, kind: input, shape index: {}]
  %s5 = inlined_call_operand.hbm [shape: bf16[512,128], index: 5, kind: input, shape index: {}]
  %s6 = inlined_call_operand.vmem [shape: f32[1,128], index: 6, kind: input, shape index: {}]
  %s7 = inlined_call_operand.vmem [shape: f32[1,128], index: 7, kind: input, shape index: {}]
  %s8 = inlined_call_operand.vmem [shape: f32[1,128], index: 8, kind: input, shape index: {}]
  %s9 = inlined_call_operand.hbm [shape: bf16[128,128], index: 9, kind: input, shape index: {}]
  %s10 = inlined_call_operand.vmem [shape: f32[1,128], index: 10, kind: input, shape index: {}]
  %s11 = inlined_call_operand.hbm [shape: f32[8,8], index: 11, kind: output, shape index: {}]
  %s12 = sld [smem:[#allocation0]]
  $region78: #{tpu_custom_call.1} parent=0
    _
  %s14 = ssub.s32 1, %s12
  %s15 = scalar_select 0, %s14, %s12
  $region1: #{tpu_custom_call.1} parent=0
    #allocation2 [shape = 'u8[4096]{0}', space=vmem, size = 0x1000, scoped, tag = 'input window, operand 0, single buffered']
    #allocation3 [shape = 's32[1]{0}', space=sflag, size = 0x4, scoped, tag = 'scoped memory for tpu_custom_call.1']
    #allocation4 [shape = 's32[1]{0}', space=sflag, size = 0x4, scoped, tag = 'scoped memory for tpu_custom_call.1']
    #allocation5 [shape = 'u8[16384]{0}', space=vmem, size = 0x4000, scoped, tag = 'input window, operand 1, single buffered']
    #allocation6 [shape = 's32[1]{0}', space=sflag, size = 0x4, scoped, tag = 'scoped memory for tpu_custom_call.1']
    #allocation7 [shape = 'u8[2048]{0}', space=vmem, size = 0x800, scoped, tag = 'input window, operand 2, single buffered']
    #allocation8 [shape = 'u8[2048]{0}', space=vmem, size = 0x800, scoped, tag = 'input window, operand 4, single buffered']
    #allocation9 [shape = 's32[1]{0}', space=sflag, size = 0x4, scoped, tag = 'scoped memory for tpu_custom_call.1']
    #allocation10 [shape = 'u8[131072]{0}', space=vmem, size = 0x20000, scoped, tag = 'input window, operand 5, single buffered']
    #allocation11 [shape = 'u8[32768]{0}', space=vmem, size = 0x8000, scoped, tag = 'input window, operand 9, single buffered']
    #allocation12 [shape = 's32[1]{0}', space=sflag, size = 0x4, scoped, tag = 'scoped memory for tpu_custom_call.1']
    #allocation13 [shape = 'u8[4096]{0}', space=vmem, size = 0x1000, scoped, tag = 'output window, operand 0, single buffered']
    %16 = vsyncpa [#allocation3], 0
    %17 = vsyncpa [#allocation6], 0
    %18 = vsyncpa [#allocation9], 0
    %19 = vsyncpa [#allocation12], 0
    %20 = vsyncpa [#allocation4], 0
    // Predicated region
    $region2: #{tpu_custom_call.1} parent=1 // pred_check
      _
    $region3: #{tpu_custom_call.1} parent=1 // pred_check_branch
      %22 = sbr.rel (0) target = $region5
    $region4: #{tpu_custom_call.1} parent=1 // pred_region
      %s24 = ssub.s32 128, 128
      %25 = vsyncadd [#allocation3], %s24
      %s27 = sshll.u32 [#allocation2], 4
      %s28 = int_to_ptr.vmem [resolvable:$true] %s27
      %30 = dma.hbm_to_vmem [thread:$0]  %s0, 128, %s28, [#allocation3]
    $region5: #{tpu_custom_call.1} parent=1 // pred_fallthru
      _
    // Predicated region
    $region6: #{tpu_custom_call.1} parent=1 // pred_check
      _
    $region7: #{tpu_custom_call.1} parent=1 // pred_check_branch
      %32 = sbr.rel (0) target = $region9
    $region8: #{tpu_custom_call.1} parent=1 // pred_region
      %s34 = ssub.s32 512, 512
      %35 = vsyncadd [#allocation6], %s34
      %s36 = sshll.u32 [#allocation5], 4
      %s37 = int_to_ptr.vmem [resolvable:$true] %s36
      %42 = dma.hbm_to_vmem [thread:$0]  %s1, 512, %s37, [#allocation6], 256, 256, 16
    $region9: #{tpu_custom_call.1} parent=1 // pred_fallthru
      _
    // Predicated region
    $region10: #{tpu_custom_call.1} parent=1 // pred_check
      _
    $region11: #{tpu_custom_call.1} parent=1 // pred_check_branch
      %44 = sbr.rel (0) target = $region13
    $region12: #{tpu_custom_call.1} parent=1 // pred_region
      %s46 = ssub.s32 64, 64
      %47 = vsyncadd [#allocation6], %s46
      %s49 = sshll.u32 [#allocation7], 4
      %s50 = int_to_ptr.vmem [resolvable:$true] %s49
      %52 = dma.hbm_to_vmem [thread:$0]  %s2, 64, %s50, [#allocation6]
    $region13: #{tpu_custom_call.1} parent=1 // pred_fallthru
      _
    // Predicated region
    $region14: #{tpu_custom_call.1} parent=1 // pred_check
      _
    $region15: #{tpu_custom_call.1} parent=1 // pred_check_branch
      %54 = sbr.rel (0) target = $region17
    $region16: #{tpu_custom_call.1} parent=1 // pred_region
      _
    $region17: #{tpu_custom_call.1} parent=1 // pred_fallthru
      _
    // Predicated region
    $region18: #{tpu_custom_call.1} parent=1 // pred_check
      _
    $region19: #{tpu_custom_call.1} parent=1 // pred_check_branch
      %56 = sbr.rel (0) target = $region21
    $region20: #{tpu_custom_call.1} parent=1 // pred_region
      %s58 = ssub.s32 64, 64
      %59 = vsyncadd [#allocation9], %s58
      %s61 = sshll.u32 [#allocation8], 4
      %s62 = int_to_ptr.vmem [resolvable:$true] %s61
      %64 = dma.hbm_to_vmem [thread:$0]  %s4, 64, %s62, [#allocation9]
    $region21: #{tpu_custom_call.1} parent=1 // pred_fallthru
      _
    // Predicated region
    $region22: #{tpu_custom_call.1} parent=1 // pred_check
      _
    $region23: #{tpu_custom_call.1} parent=1 // pred_check_branch
      %66 = sbr.rel (0) target = $region25
    $region24: #{tpu_custom_call.1} parent=1 // pred_region
      %s68 = ssub.s32 4096, 4096
      %69 = vsyncadd [#allocation9], %s68
      %s70 = sshll.u32 [#allocation10], 4
      %s71 = int_to_ptr.vmem [resolvable:$true] %s70
      %76 = dma.hbm_to_vmem [thread:$0]  %s5, 4096, %s71, [#allocation9], 64, 64, 4
    $region25: #{tpu_custom_call.1} parent=1 // pred_fallthru
      _
    // Predicated region
    $region26: #{tpu_custom_call.1} parent=1 // pred_check
      _
    $region27: #{tpu_custom_call.1} parent=1 // pred_check_branch
      %78 = sbr.rel (0) target = $region29
    $region28: #{tpu_custom_call.1} parent=1 // pred_region
      _
    $region29: #{tpu_custom_call.1} parent=1 // pred_fallthru
      _
    // Predicated region
    $region30: #{tpu_custom_call.1} parent=1 // pred_check
      _
    $region31: #{tpu_custom_call.1} parent=1 // pred_check_branch
      %80 = sbr.rel (0) target = $region33
    $region32: #{tpu_custom_call.1} parent=1 // pred_region
      _
    $region33: #{tpu_custom_call.1} parent=1 // pred_fallthru
      _
    // Predicated region
    $region34: #{tpu_custom_call.1} parent=1 // pred_check
      _
    $region35: #{tpu_custom_call.1} parent=1 // pred_check_branch
      %82 = sbr.rel (0) target = $region37
    $region36: #{tpu_custom_call.1} parent=1 // pred_region
      _
    $region37: #{tpu_custom_call.1} parent=1 // pred_fallthru
      _
    // Predicated region
    $region38: #{tpu_custom_call.1} parent=1 // pred_check
      _
    $region39: #{tpu_custom_call.1} parent=1 // pred_check_branch
      %84 = sbr.rel (0) target = $region41
    $region40: #{tpu_custom_call.1} parent=1 // pred_region
      %s86 = ssub.s32 1024, 1024
      %87 = vsyncadd [#allocation12], %s86
      %s88 = sshll.u32 [#allocation11], 4
      %s89 = int_to_ptr.vmem [resolvable:$true] %s88
      %94 = dma.hbm_to_vmem [thread:$0]  %s9, 1024, %s89, [#allocation12], 64, 64, 4
    $region41: #{tpu_custom_call.1} parent=1 // pred_fallthru
      _
    // Predicated region
    $region42: #{tpu_custom_call.1} parent=1 // pred_check
      _
    $region43: #{tpu_custom_call.1} parent=1 // pred_check_branch
      %96 = sbr.rel (0) target = $region45
    $region44: #{tpu_custom_call.1} parent=1 // pred_region
      _
    $region45: #{tpu_custom_call.1} parent=1 // pred_fallthru
      _
    // Predicated region
    $region46: #{tpu_custom_call.1} parent=1 // pred_check
      _
    $region47: #{tpu_custom_call.1} parent=1 // pred_check_branch
      %98 = sbr.rel (0) target = $region49
    $region48: #{tpu_custom_call.1} parent=1 // pred_region
      %99 = dma.done [#allocation3], 128
    $region49: #{tpu_custom_call.1} parent=1 // pred_fallthru
      _
    // Predicated region
    $region50: #{tpu_custom_call.1} parent=1 // pred_check
      _
    $region51: #{tpu_custom_call.1} parent=1 // pred_check_branch
      %101 = sbr.rel (0) target = $region53
    $region52: #{tpu_custom_call.1} parent=1 // pred_region
      %102 = dma.done [#allocation6], 512
    $region53: #{tpu_custom_call.1} parent=1 // pred_fallthru
      _
    // Predicated region
    $region54: #{tpu_custom_call.1} parent=1 // pred_check
      _
    $region55: #{tpu_custom_call.1} parent=1 // pred_check_branch
      %104 = sbr.rel (0) target = $region57
    $region56: #{tpu_custom_call.1} parent=1 // pred_region
      %105 = dma.done [#allocation6], 64
    $region57: #{tpu_custom_call.1} parent=1 // pred_fallthru
      _
    // Predicated region
    $region58: #{tpu_custom_call.1} parent=1 // pred_check
      _
    $region59: #{tpu_custom_call.1} parent=1 // pred_check_branch
      %107 = sbr.rel (0) target = $region61
    $region60: #{tpu_custom_call.1} parent=1 // pred_region
      %108 = dma.done [#allocation9], 64
    $region61: #{tpu_custom_call.1} parent=1 // pred_fallthru
      _
    // Predicated region
    $region62: #{tpu_custom_call.1} parent=1 // pred_check
      _
    $region63: #{tpu_custom_call.1} parent=1 // pred_check_branch
      %110 = sbr.rel (0) target = $region65
    $region64: #{tpu_custom_call.1} parent=1 // pred_region
      %111 = dma.done [#allocation9], 4096
    $region65: #{tpu_custom_call.1} parent=1 // pred_fallthru
      _
    // Predicated region
    $region66: #{tpu_custom_call.1} parent=1 // pred_check
      _
    $region67: #{tpu_custom_call.1} parent=1 // pred_check_branch
      %113 = sbr.rel (0) target = $region69
    $region68: #{tpu_custom_call.1} parent=1 // pred_region
      %114 = dma.done [#allocation12], 1024
    $region69: #{tpu_custom_call.1} parent=1 // pred_fallthru
      _
    %v116 = vld [vmem:[#allocation2] sm:$0xff]
    %v117 = vpack.c.bf16 %v116, %v116
    %v118 = vld [vmem:[#allocation5] sm:$0xff]
    %v119 = vld [vmem:[#allocation5 + $0x8] sm:$0xff]
    %v120 = vld [vmem:[#allocation5 + $0x10] sm:$0xff]
    %v121 = vld [vmem:[#allocation5 + $0x18] sm:$0xff]
    %v122 = vld [vmem:[#allocation7] sm:$0xf]
    %v124 = vlaneseq
    %v125 = vshrl.u32 %v124, 7
    %v126 = vsub.s32 0, %v125
    %v127 = vrot.slane %v122, %v126
    %v128 = vlaneseq
    %v129 = vshrl.u32 %v128, 7
    %v130 = vsub.s32 1, %v129
    %v131 = vrot.slane %v122, %v130
    %v132 = vlaneseq
    %v133 = vshrl.u32 %v132, 7
    %v134 = vsub.s32 2, %v133
    %v135 = vrot.slane %v122, %v134
    %v136 = vlaneseq
    %v137 = vshrl.u32 %v136, 7
    %v138 = vsub.s32 3, %v137
    %v139 = vrot.slane %v122, %v138
    %v148 = vunpack.c.l.b16 %v118
    %v149 = vunpack.c.h.b16 %v118
    %v150 = vunpack.c.l.b16 %v119
    %v151 = vunpack.c.h.b16 %v119
    %v152 = vunpack.c.l.b16 %v120
    %v153 = vunpack.c.h.b16 %v120
    %v154 = vunpack.c.l.b16 %v121
    %v155 = vunpack.c.h.b16 %v121
    %v156 = vpack.c.b16 %v152, %v148
    %v157 = vpack.c.b16 %v153, %v149
    %v158 = vpack.c.b16 %v154, %v150
    %v159 = vpack.c.b16 %v155, %v151
    %vm164 = vcmask 130048
    %v166 = vsel %vm164, %v117, 0
    %168 = vmatprep.subr.bf16.mxu0 0
    %169 = vmatpush1.bf16.msra.mxu0 0
    %170 = vmatprep.subr.bf16.mxu0 0
    %171 = vmatpush1.bf16.msra.mxu0 0
    %172 = vmatprep.subr.bf16.mxu0 0
    %173 = vmatpush1.bf16.msra.mxu0 0
    %174 = vmatprep.subr.bf16.mxu0 0
    %175 = vmatpush1.bf16.msra.mxu0 0
    %176 = vmatprep.subr.bf16.mxu0 0
    %177 = vmatpush1.bf16.msra.mxu0 0
    %178 = vmatprep.subr.bf16.mxu0 0
    %179 = vmatpush1.bf16.msra.mxu0 0
    %180 = vmatprep.subr.bf16.mxu0 0
    %181 = vmatpush1.bf16.msra.mxu0 0
    %182 = vmatprep.subr.bf16.mxu0 %v157
    %183 = vmatpush1.bf16.msra.mxu0 %v156
    %184 = vmatprep.subr.bf16.mxu0 0
    %185 = vmatpush2.bf16.msra.mxu0 0
    %186 = vmatprep.subr.bf16.mxu0 0
    %187 = vmatpush2.bf16.msra.mxu0 0
    %188 = vmatprep.subr.bf16.mxu0 0
    %189 = vmatpush2.bf16.msra.mxu0 0
    %190 = vmatprep.subr.bf16.mxu0 0
    %191 = vmatpush2.bf16.msra.mxu0 0
    %192 = vmatprep.subr.bf16.mxu0 0
    %193 = vmatpush2.bf16.msra.mxu0 0
    %194 = vmatprep.subr.bf16.mxu0 0
    %195 = vmatpush2.bf16.msra.mxu0 0
    %196 = vmatprep.subr.bf16.mxu0 0
    %197 = vmatpush2.bf16.msra.mxu0 0
    %198 = vmatprep.subr.bf16.mxu0 0
    %199 = vmatpush2.bf16.msra.mxu0 0
    %200 = vmatprep.mubr.bf16.mxu0 0
    %201 = vmatmul.mubr.bf16.gmra.mxu0 %v166
    %v202 = vpop.f32.mrf.mxu0
    %v203 = vadd.f32 %v127, %v202
    %v204 = vpop.f32.mrf.mxu0
    %v205 = vadd.f32 %v131, %v204
    %v206 = vpop.f32.mrf.mxu0
    %v207 = vpop.f32.mrf.mxu0
    %208 = vdwg.mxu0
    %209 = vmatprep.subr.bf16.mxu0 0
    %210 = vmatpush1.bf16.msra.mxu0 0
    %211 = vmatprep.subr.bf16.mxu0 0
    %212 = vmatpush1.bf16.msra.mxu0 0
    %213 = vmatprep.subr.bf16.mxu0 0
    %214 = vmatpush1.bf16.msra.mxu0 0
    %215 = vmatprep.subr.bf16.mxu0 0
    %216 = vmatpush1.bf16.msra.mxu0 0
    %217 = vmatprep.subr.bf16.mxu0 0
    %218 = vmatpush1.bf16.msra.mxu0 0
    %219 = vmatprep.subr.bf16.mxu0 0
    %220 = vmatpush1.bf16.msra.mxu0 0
    %221 = vmatprep.subr.bf16.mxu0 0
    %222 = vmatpush1.bf16.msra.mxu0 0
    %223 = vmatprep.subr.bf16.mxu0 %v159
    %224 = vmatpush1.bf16.msra.mxu0 %v158
    %225 = vmatprep.subr.bf16.mxu0 0
    %226 = vmatpush2.bf16.msra.mxu0 0
    %227 = vmatprep.subr.bf16.mxu0 0
    %228 = vmatpush2.bf16.msra.mxu0 0
    %229 = vmatprep.subr.bf16.mxu0 0
    %230 = vmatpush2.bf16.msra.mxu0 0
    %231 = vmatprep.subr.bf16.mxu0 0
    %232 = vmatpush2.bf16.msra.mxu0 0
    %233 = vmatprep.subr.bf16.mxu0 0
    %234 = vmatpush2.bf16.msra.mxu0 0
    %235 = vmatprep.subr.bf16.mxu0 0
    %236 = vmatpush2.bf16.msra.mxu0 0
    %237 = vmatprep.subr.bf16.mxu0 0
    %238 = vmatpush2.bf16.msra.mxu0 0
    %239 = vmatprep.subr.bf16.mxu0 0
    %240 = vmatpush2.bf16.msra.mxu0 0
    %241 = vmatprep.mubr.bf16.mxu0 0
    %242 = vmatmul.mubr.bf16.gmra.mxu0 %v166
    %v243 = vpop.f32.mrf.mxu0
    %v244 = vadd.f32 %v135, %v243
    %v245 = vpop.f32.mrf.mxu0
    %v246 = vadd.f32 %v139, %v245
    %v247 = vpop.f32.mrf.mxu0
    %v248 = vpop.f32.mrf.mxu0
    %249 = vdwg.mxu0
    %v250 = vld [vmem:[%s3] sm:$0xf]
    %v251 = vld [vmem:[#allocation8] sm:$0xf]
    %v252 = vadd.f32 %v203, %v205
    %v253 = vadd.f32 %v252, %v244
    %v254 = vadd.f32 %v253, %v246
    %255 = vadd.xlane.f32.xlu0 %v254
    %v256 = vpop.xlane.xlu0 %255
    %v257 = vmul.f32 %v256, 0.0025
    %v258 = vsub.f32 %v203, %v257
    %v259 = vsub.f32 %v205, %v257
    %v260 = vsub.f32 %v244, %v257
    %v261 = vsub.f32 %v246, %v257
    %v262 = vmul.f32 %v258, %v258
    %v263 = vmul.f32 %v259, %v259
    %v264 = vmul.f32 %v260, %v260
    %v265 = vmul.f32 %v261, %v261
    %v266 = vadd.f32 %v262, %v263
    %v267 = vadd.f32 %v266, %v264
    %v268 = vadd.f32 %v267, %v265
    %269 = vadd.xlane.f32.xlu0 %v268
    %v270 = vpop.xlane.xlu0 %269
    %v271 = vmul.f32 %v257, %v257
    %v272 = vmul.f32 %v271, 112.0
    %v273 = vsub.f32 %v270, %v272
    %v274 = vmul.f32 %v273, 0.0025062656
    %v275 = vmax.f32 %v274, 0.0
    %v276 = vrsqrt.pop %v275
    %v277 = vmul.f32 %v275, %v276
    %vm278 = vcmp.eq.f32.partialorder %v275, inf
    %v279 = vsel %vm278, %v275, %v277
    %vm280 = vcmp.eq.f32.partialorder %v275, 0.0
    %v281 = vand.u32 %v275, 2147483648
    %v282 = vsel %vm280, %v281, %v279
    %v283 = vadd.f32 %v282, 1e-06
    %v284 = vrcp.pop %v283
    %v285 = vmul.f32 %v283, %v284
    %v286 = vsub.f32 2.0, %v285
    %v287 = vmul.f32 %v284, %v286
    %v288 = vmul.f32 %v258, %v287
    %v289 = vmul.f32 %v259, %v287
    %v290 = vmul.f32 %v260, %v287
    %v291 = vmul.f32 %v261, %v287
    %v293 = vlaneseq
    %v294 = vshrl.u32 %v293, 7
    %v295 = vsub.s32 0, %v294
    %v296 = vrot.slane %v250, %v295
    %v297 = vlaneseq
    %v298 = vshrl.u32 %v297, 7
    %v299 = vsub.s32 1, %v298
    %v300 = vrot.slane %v250, %v299
    %v301 = vlaneseq
    %v302 = vshrl.u32 %v301, 7
    %v303 = vsub.s32 2, %v302
    %v304 = vrot.slane %v250, %v303
    %v305 = vlaneseq
    %v306 = vshrl.u32 %v305, 7
    %v307 = vsub.s32 3, %v306
    %v308 = vrot.slane %v250, %v307
    %v313 = vmul.f32 %v296, %v288
    %v314 = vmul.f32 %v300, %v289
    %v315 = vmul.f32 %v304, %v290
    %v316 = vmul.f32 %v308, %v291
    %v318 = vlaneseq
    %v319 = vshrl.u32 %v318, 7
    %v320 = vsub.s32 0, %v319
    %v321 = vrot.slane %v251, %v320
    %v322 = vlaneseq
    %v323 = vshrl.u32 %v322, 7
    %v324 = vsub.s32 1, %v323
    %v325 = vrot.slane %v251, %v324
    %v326 = vlaneseq
    %v327 = vshrl.u32 %v326, 7
    %v328 = vsub.s32 2, %v327
    %v329 = vrot.slane %v251, %v328
    %v330 = vlaneseq
    %v331 = vshrl.u32 %v330, 7
    %v332 = vsub.s32 3, %v331
    %v333 = vrot.slane %v251, %v332
    %v338 = vadd.f32 %v313, %v321
    %v339 = vadd.f32 %v314, %v325
    %v340 = vadd.f32 %v315, %v329
    %v341 = vadd.f32 %v316, %v333
    %v342 = vtanh.pop %v338
    %v343 = vtanh.pop %v339
    %v344 = vtanh.pop %v340
    %v345 = vtanh.pop %v341
    %v346 = vpack.c.bf16 %v342, %v342
    %v347 = vpack.c.bf16 %v343, %v343
    %v348 = vpack.c.bf16 %v344, %v344
    %v349 = vpack.c.bf16 %v345, %v345
    %v350 = vld [vmem:[#allocation10] sm:$0xf]
    %v351 = vld [vmem:[#allocation10 + $0x4] sm:$0xf]
    %v352 = vld [vmem:[#allocation10 + $0x8] sm:$0xf]
    %v353 = vld [vmem:[#allocation10 + $0xc] sm:$0xf]
    %v354 = vld [vmem:[#allocation10 + $0x10] sm:$0xf]
    %v355 = vld [vmem:[#allocation10 + $0x14] sm:$0xf]
    %v356 = vld [vmem:[#allocation10 + $0x18] sm:$0xf]
    %v357 = vld [vmem:[#allocation10 + $0x1c] sm:$0xf]
    %v358 = vld [vmem:[#allocation10 + $0x20] sm:$0xf]
    %v359 = vld [vmem:[#allocation10 + $0x24] sm:$0xf]
    %v360 = vld [vmem:[#allocation10 + $0x28] sm:$0xf]
    %v361 = vld [vmem:[#allocation10 + $0x2c] sm:$0xf]
    %v362 = vld [vmem:[#allocation10 + $0x30] sm:$0xf]
    %v363 = vld [vmem:[#allocation10 + $0x34] sm:$0xf]
    %v364 = vld [vmem:[#allocation10 + $0x38] sm:$0xf]
    %v365 = vld [vmem:[#allocation10 + $0x3c] sm:$0xf]
    %v366 = vld [vmem:[#allocation10 + $0x40] sm:$0xf]
    %v367 = vld [vmem:[#allocation10 + $0x44] sm:$0xf]
    %v368 = vld [vmem:[#allocation10 + $0x48] sm:$0xf]
    %v369 = vld [vmem:[#allocation10 + $0x4c] sm:$0xf]
    %v370 = vld [vmem:[#allocation10 + $0x50] sm:$0xf]
    %v371 = vld [vmem:[#allocation10 + $0x54] sm:$0xf]
    %v372 = vld [vmem:[#allocation10 + $0x58] sm:$0xf]
    %v373 = vld [vmem:[#allocation10 + $0x5c] sm:$0xf]
    %v374 = vld [vmem:[#allocation10 + $0x60] sm:$0xf]
    %v375 = vld [vmem:[#allocation10 + $0x64] sm:$0xf]
    %v376 = vld [vmem:[#allocation10 + $0x68] sm:$0xf]
    %v377 = vld [vmem:[#allocation10 + $0x6c] sm:$0xf]
    %v378 = vld [vmem:[#allocation10 + $0x70] sm:$0xf]
    %v379 = vld [vmem:[#allocation10 + $0x74] sm:$0xf]
    %v380 = vld [vmem:[#allocation10 + $0x78] sm:$0xf]
    %v381 = vld [vmem:[#allocation10 + $0x7c] sm:$0xf]
    %v382 = vld [vmem:[#allocation10 + $0x80] sm:$0xf]
    %v383 = vld [vmem:[#allocation10 + $0x84] sm:$0xf]
    %v384 = vld [vmem:[#allocation10 + $0x88] sm:$0xf]
    %v385 = vld [vmem:[#allocation10 + $0x8c] sm:$0xf]
    %v386 = vld [vmem:[#allocation10 + $0x90] sm:$0xf]
    %v387 = vld [vmem:[#allocation10 + $0x94] sm:$0xf]
    %v388 = vld [vmem:[#allocation10 + $0x98] sm:$0xf]
    %v389 = vld [vmem:[#allocation10 + $0x9c] sm:$0xf]
    %v390 = vld [vmem:[#allocation10 + $0xa0] sm:$0xf]
    %v391 = vld [vmem:[#allocation10 + $0xa4] sm:$0xf]
    %v392 = vld [vmem:[#allocation10 + $0xa8] sm:$0xf]
    %v393 = vld [vmem:[#allocation10 + $0xac] sm:$0xf]
    %v394 = vld [vmem:[#allocation10 + $0xb0] sm:$0xf]
    %v395 = vld [vmem:[#allocation10 + $0xb4] sm:$0xf]
    %v396 = vld [vmem:[#allocation10 + $0xb8] sm:$0xf]
    %v397 = vld [vmem:[#allocation10 + $0xbc] sm:$0xf]
    %v398 = vld [vmem:[#allocation10 + $0xc0] sm:$0xf]
    %v399 = vld [vmem:[#allocation10 + $0xc4] sm:$0xf]
    %v400 = vld [vmem:[#allocation10 + $0xc8] sm:$0xf]
    %v401 = vld [vmem:[#allocation10 + $0xcc] sm:$0xf]
    %v402 = vld [vmem:[#allocation10 + $0xd0] sm:$0xf]
    %v403 = vld [vmem:[#allocation10 + $0xd4] sm:$0xf]
    %v404 = vld [vmem:[#allocation10 + $0xd8] sm:$0xf]
    %v405 = vld [vmem:[#allocation10 + $0xdc] sm:$0xf]
    %v406 = vld [vmem:[#allocation10 + $0xe0] sm:$0xf]
    %v407 = vld [vmem:[#allocation10 + $0xe4] sm:$0xf]
    %v408 = vld [vmem:[#allocation10 + $0xe8] sm:$0xf]
    %v409 = vld [vmem:[#allocation10 + $0xec] sm:$0xf]
    %v410 = vld [vmem:[#allocation10 + $0xf0] sm:$0xf]
    %v411 = vld [vmem:[#allocation10 + $0xf4] sm:$0xf]
    %v412 = vld [vmem:[#allocation10 + $0xf8] sm:$0xf]
    %v413 = vld [vmem:[#allocation10 + $0xfc] sm:$0xf]
    %v414 = vld [vmem:[%s6] sm:$0x1]
    %v416 = vlaneseq
    %v417 = vshrl.u32 %v416, 7
    %v418 = vsub.s32 0, %v417
    %v419 = vrot.slane %v414, %v418
    %v485 = vunpack.c.l.b16 %v350
    %v486 = vunpack.c.l.b16 %v351
    %v487 = vunpack.c.l.b16 %v352
    %v488 = vunpack.c.l.b16 %v353
    %v489 = vunpack.c.l.b16 %v354
    %v490 = vunpack.c.l.b16 %v355
    %v491 = vunpack.c.l.b16 %v356
    %v492 = vunpack.c.l.b16 %v357
    %v493 = vunpack.c.l.b16 %v358
    %v494 = vunpack.c.l.b16 %v359
    %v495 = vunpack.c.l.b16 %v360
    %v496 = vunpack.c.l.b16 %v361
    %v497 = vunpack.c.l.b16 %v362
    %v498 = vunpack.c.l.b16 %v363
    %v499 = vunpack.c.l.b16 %v364
    %v500 = vunpack.c.l.b16 %v365
    %v501 = vunpack.c.l.b16 %v366
    %v502 = vunpack.c.l.b16 %v367
    %v503 = vunpack.c.l.b16 %v368
    %v504 = vunpack.c.l.b16 %v369
    %v505 = vunpack.c.l.b16 %v370
    %v506 = vunpack.c.l.b16 %v371
    %v507 = vunpack.c.l.b16 %v372
    %v508 = vunpack.c.l.b16 %v373
    %v509 = vunpack.c.l.b16 %v374
    %v510 = vunpack.c.l.b16 %v375
    %v511 = vunpack.c.l.b16 %v376
    %v512 = vunpack.c.l.b16 %v377
    %v513 = vunpack.c.l.b16 %v378
    %v514 = vunpack.c.l.b16 %v379
    %v515 = vunpack.c.l.b16 %v380
    %v516 = vunpack.c.l.b16 %v381
    %v517 = vunpack.c.l.b16 %v382
    %v518 = vunpack.c.l.b16 %v383
    %v519 = vunpack.c.l.b16 %v384
    %v520 = vunpack.c.l.b16 %v385
    %v521 = vunpack.c.l.b16 %v386
    %v522 = vunpack.c.l.b16 %v387
    %v523 = vunpack.c.l.b16 %v388
    %v524 = vunpack.c.l.b16 %v389
    %v525 = vunpack.c.l.b16 %v390
    %v526 = vunpack.c.l.b16 %v391
    %v527 = vunpack.c.l.b16 %v392
    %v528 = vunpack.c.l.b16 %v393
    %v529 = vunpack.c.l.b16 %v394
    %v530 = vunpack.c.l.b16 %v395
    %v531 = vunpack.c.l.b16 %v396
    %v532 = vunpack.c.l.b16 %v397
    %v533 = vunpack.c.l.b16 %v398
    %v534 = vunpack.c.l.b16 %v399
    %v535 = vunpack.c.l.b16 %v400
    %v536 = vunpack.c.l.b16 %v401
    %v537 = vunpack.c.l.b16 %v402
    %v538 = vunpack.c.l.b16 %v403
    %v539 = vunpack.c.l.b16 %v404
    %v540 = vunpack.c.l.b16 %v405
    %v541 = vunpack.c.l.b16 %v406
    %v542 = vunpack.c.l.b16 %v407
    %v543 = vunpack.c.l.b16 %v408
    %v544 = vunpack.c.l.b16 %v409
    %v545 = vunpack.c.l.b16 %v410
    %v546 = vunpack.c.l.b16 %v411
    %v547 = vunpack.c.l.b16 %v412
    %v548 = vunpack.c.l.b16 %v413
    %v549 = vpack.c.b16 %v486, %v485
    %v550 = vpack.c.b16 %v488, %v487
    %v551 = vpack.c.b16 %v490, %v489
    %v552 = vpack.c.b16 %v492, %v491
    %v553 = vpack.c.b16 %v494, %v493
    %v554 = vpack.c.b16 %v496, %v495
    %v555 = vpack.c.b16 %v498, %v497
    %v556 = vpack.c.b16 %v500, %v499
    %v557 = vpack.c.b16 %v502, %v501
    %v558 = vpack.c.b16 %v504, %v503
    %v559 = vpack.c.b16 %v506, %v505
    %v560 = vpack.c.b16 %v508, %v507
    %v561 = vpack.c.b16 %v510, %v509
    %v562 = vpack.c.b16 %v512, %v511
    %v563 = vpack.c.b16 %v514, %v513
    %v564 = vpack.c.b16 %v516, %v515
    %v565 = vpack.c.b16 %v518, %v517
    %v566 = vpack.c.b16 %v520, %v519
    %v567 = vpack.c.b16 %v522, %v521
    %v568 = vpack.c.b16 %v524, %v523
    %v569 = vpack.c.b16 %v526, %v525
    %v570 = vpack.c.b16 %v528, %v527
    %v571 = vpack.c.b16 %v530, %v529
    %v572 = vpack.c.b16 %v532, %v531
    %v573 = vpack.c.b16 %v534, %v533
    %v574 = vpack.c.b16 %v536, %v535
    %v575 = vpack.c.b16 %v538, %v537
    %v576 = vpack.c.b16 %v540, %v539
    %v577 = vpack.c.b16 %v542, %v541
    %v578 = vpack.c.b16 %v544, %v543
    %v579 = vpack.c.b16 %v546, %v545
    %v580 = vpack.c.b16 %v548, %v547
    %613 = vmatprep.subr.bf16.mxu0 0
    %614 = vmatpush1.bf16.msra.mxu0 %v556
    %615 = vmatprep.subr.bf16.mxu0 0
    %616 = vmatpush1.bf16.msra.mxu0 %v555
    %617 = vmatprep.subr.bf16.mxu0 0
    %618 = vmatpush1.bf16.msra.mxu0 %v554
    %619 = vmatprep.subr.bf16.mxu0 0
    %620 = vmatpush1.bf16.msra.mxu0 %v553
    %621 = vmatprep.subr.bf16.mxu0 0
    %622 = vmatpush1.bf16.msra.mxu0 %v552
    %623 = vmatprep.subr.bf16.mxu0 0
    %624 = vmatpush1.bf16.msra.mxu0 %v551
    %625 = vmatprep.subr.bf16.mxu0 0
    %626 = vmatpush1.bf16.msra.mxu0 %v550
    %627 = vmatprep.subr.bf16.mxu0 0
    %628 = vmatpush1.bf16.msra.mxu0 %v549
    %629 = vmatprep.subr.bf16.mxu0 0
    %630 = vmatpush2.bf16.msra.mxu0 %v564
    %631 = vmatprep.subr.bf16.mxu0 0
    %632 = vmatpush2.bf16.msra.mxu0 %v563
    %633 = vmatprep.subr.bf16.mxu0 0
    %634 = vmatpush2.bf16.msra.mxu0 %v562
    %635 = vmatprep.subr.bf16.mxu0 0
    %636 = vmatpush2.bf16.msra.mxu0 %v561
    %637 = vmatprep.subr.bf16.mxu0 0
    %638 = vmatpush2.bf16.msra.mxu0 %v560
    %639 = vmatprep.subr.bf16.mxu0 0
    %640 = vmatpush2.bf16.msra.mxu0 %v559
    %641 = vmatprep.subr.bf16.mxu0 0
    %642 = vmatpush2.bf16.msra.mxu0 %v558
    %643 = vmatprep.subr.bf16.mxu0 0
    %644 = vmatpush2.bf16.msra.mxu0 %v557
    %645 = vmatprep.mubr.bf16.mxu0 %v347
    %646 = vmatmul.mubr.bf16.gmra.mxu0 %v346
    %v647 = vpop.f32.mrf.mxu0
    %v648 = vadd.f32 %v419, %v647
    %v649 = vpop.f32.mrf.mxu0
    %v650 = vpop.f32.mrf.mxu0
    %v651 = vpop.f32.mrf.mxu0
    %652 = vdwg.mxu0
    %653 = vmatprep.subr.bf16.mxu0 0
    %654 = vmatpush1.bf16.msra.mxu0 %v572
    %655 = vmatprep.subr.bf16.mxu0 0
    %656 = vmatpush1.bf16.msra.mxu0 %v571
    %657 = vmatprep.subr.bf16.mxu0 0
    %658 = vmatpush1.bf16.msra.mxu0 %v570
    %659 = vmatprep.subr.bf16.mxu0 0
    %660 = vmatpush1.bf16.msra.mxu0 %v569
    %661 = vmatprep.subr.bf16.mxu0 0
    %662 = vmatpush1.bf16.msra.mxu0 %v568
    %663 = vmatprep.subr.bf16.mxu0 0
    %664 = vmatpush1.bf16.msra.mxu0 %v567
    %665 = vmatprep.subr.bf16.mxu0 0
    %666 = vmatpush1.bf16.msra.mxu0 %v566
    %667 = vmatprep.subr.bf16.mxu0 0
    %668 = vmatpush1.bf16.msra.mxu0 %v565
    %669 = vmatprep.subr.bf16.mxu0 0
    %670 = vmatpush2.bf16.msra.mxu0 %v580
    %671 = vmatprep.subr.bf16.mxu0 0
    %672 = vmatpush2.bf16.msra.mxu0 %v579
    %673 = vmatprep.subr.bf16.mxu0 0
    %674 = vmatpush2.bf16.msra.mxu0 %v578
    %675 = vmatprep.subr.bf16.mxu0 0
    %676 = vmatpush2.bf16.msra.mxu0 %v577
    %677 = vmatprep.subr.bf16.mxu0 0
    %678 = vmatpush2.bf16.msra.mxu0 %v576
    %679 = vmatprep.subr.bf16.mxu0 0
    %680 = vmatpush2.bf16.msra.mxu0 %v575
    %681 = vmatprep.subr.bf16.mxu0 0
    %682 = vmatpush2.bf16.msra.mxu0 %v574
    %683 = vmatprep.subr.bf16.mxu0 0
    %684 = vmatpush2.bf16.msra.mxu0 %v573
    %685 = vmatprep.mubr.bf16.mxu0 %v349
    %686 = vmatmul.mubr.bf16.gmra.mxu0 %v348
    %v687 = vpop.f32.mrf.mxu0
    %v688 = vadd.f32 %v648, %v687
    %v689 = vpop.f32.mrf.mxu0
    %v690 = vpop.f32.mrf.mxu0
    %v691 = vpop.f32.mrf.mxu0
    %692 = vdwg.mxu0
    %v693 = vld [vmem:[%s7] sm:$0x1]
    %v694 = vld [vmem:[%s8] sm:$0x1]
    %695 = vadd.xlane.f32.xlu0 %v688
    %v696 = vpop.xlane.xlu0 %695
    %v697 = vmul.f32 %v696, 0.03125
    %v698 = vsub.f32 %v688, %v697
    %v699 = vmul.f32 %v698, %v698
    %700 = vadd.xlane.f32.xlu0 %v699
    %v701 = vpop.xlane.xlu0 %700
    %v702 = vmul.f32 %v697, %v697
    %v703 = vmul.f32 %v702, 96.0
    %v704 = vsub.f32 %v701, %v703
    %v705 = vmul.f32 %v704, 0.032258064
    %v706 = vmax.f32 %v705, 0.0
    %v707 = vrsqrt.pop %v706
    %v708 = vmul.f32 %v706, %v707
    %vm709 = vcmp.eq.f32.partialorder %v706, inf
    %v710 = vsel %vm709, %v706, %v708
    %vm711 = vcmp.eq.f32.partialorder %v706, 0.0
    %v712 = vand.u32 %v706, 2147483648
    %v713 = vsel %vm711, %v712, %v710
    %v714 = vadd.f32 %v713, 1e-06
    %v715 = vrcp.pop %v714
    %v716 = vmul.f32 %v714, %v715
    %v717 = vsub.f32 2.0, %v716
    %v718 = vmul.f32 %v715, %v717
    %v719 = vmul.f32 %v698, %v718
    %v721 = vlaneseq
    %v722 = vshrl.u32 %v721, 7
    %v723 = vsub.s32 0, %v722
    %v724 = vrot.slane %v693, %v723
    %v726 = vmul.f32 %v724, %v719
    %v728 = vlaneseq
    %v729 = vshrl.u32 %v728, 7
    %v730 = vsub.s32 0, %v729
    %v731 = vrot.slane %v694, %v730
    %v733 = vadd.f32 %v726, %v731
    %v734 = vtanh.pop %v733
    %v735 = vpack.c.bf16 %v734, %v734
    %v736 = vld [vmem:[#allocation11] sm:$0xf]
    %v737 = vld [vmem:[#allocation11 + $0x4] sm:$0xf]
    %v738 = vld [vmem:[#allocation11 + $0x8] sm:$0xf]
    %v739 = vld [vmem:[#allocation11 + $0xc] sm:$0xf]
    %v740 = vld [vmem:[#allocation11 + $0x10] sm:$0xf]
    %v741 = vld [vmem:[#allocation11 + $0x14] sm:$0xf]
    %v742 = vld [vmem:[#allocation11 + $0x18] sm:$0xf]
    %v743 = vld [vmem:[#allocation11 + $0x1c] sm:$0xf]
    %v744 = vld [vmem:[#allocation11 + $0x20] sm:$0xf]
    %v745 = vld [vmem:[#allocation11 + $0x24] sm:$0xf]
    %v746 = vld [vmem:[#allocation11 + $0x28] sm:$0xf]
    %v747 = vld [vmem:[#allocation11 + $0x2c] sm:$0xf]
    %v748 = vld [vmem:[#allocation11 + $0x30] sm:$0xf]
    %v749 = vld [vmem:[#allocation11 + $0x34] sm:$0xf]
    %v750 = vld [vmem:[#allocation11 + $0x38] sm:$0xf]
    %v751 = vld [vmem:[#allocation11 + $0x3c] sm:$0xf]
    %v752 = vld [vmem:[%s10] sm:$0x1]
    %v754 = vlaneseq
    %v755 = vshrl.u32 %v754, 7
    %v756 = vsub.s32 0, %v755
    %v757 = vrot.slane %v752, %v756
    %v775 = vunpack.c.l.b16 %v736
    %v776 = vunpack.c.l.b16 %v737
    %v777 = vunpack.c.l.b16 %v738
    %v778 = vunpack.c.l.b16 %v739
    %v779 = vunpack.c.l.b16 %v740
    %v780 = vunpack.c.l.b16 %v741
    %v781 = vunpack.c.l.b16 %v742
    %v782 = vunpack.c.l.b16 %v743
    %v783 = vunpack.c.l.b16 %v744
    %v784 = vunpack.c.l.b16 %v745
    %v785 = vunpack.c.l.b16 %v746
    %v786 = vunpack.c.l.b16 %v747
    %v787 = vunpack.c.l.b16 %v748
    %v788 = vunpack.c.l.b16 %v749
    %v789 = vunpack.c.l.b16 %v750
    %v790 = vunpack.c.l.b16 %v751
    %v791 = vpack.c.b16 %v776, %v775
    %v792 = vpack.c.b16 %v778, %v777
    %v793 = vpack.c.b16 %v780, %v779
    %v794 = vpack.c.b16 %v782, %v781
    %v795 = vpack.c.b16 %v784, %v783
    %v796 = vpack.c.b16 %v786, %v785
    %v797 = vpack.c.b16 %v788, %v787
    %v798 = vpack.c.b16 %v790, %v789
    %807 = vmatprep.subr.bf16.mxu0 0
    %808 = vmatpush1.bf16.msra.mxu0 %v798
    %809 = vmatprep.subr.bf16.mxu0 0
    %810 = vmatpush1.bf16.msra.mxu0 %v797
    %811 = vmatprep.subr.bf16.mxu0 0
    %812 = vmatpush1.bf16.msra.mxu0 %v796
    %813 = vmatprep.subr.bf16.mxu0 0
    %814 = vmatpush1.bf16.msra.mxu0 %v795
    %815 = vmatprep.subr.bf16.mxu0 0
    %816 = vmatpush1.bf16.msra.mxu0 %v794
    %817 = vmatprep.subr.bf16.mxu0 0
    %818 = vmatpush1.bf16.msra.mxu0 %v793
    %819 = vmatprep.subr.bf16.mxu0 0
    %820 = vmatpush1.bf16.msra.mxu0 %v792
    %821 = vmatprep.subr.bf16.mxu0 0
    %822 = vmatpush1.bf16.msra.mxu0 %v791
    %823 = vmatprep.subr.bf16.mxu0 0
    %824 = vmatpush2.bf16.msra.mxu0 0
    %825 = vmatprep.subr.bf16.mxu0 0
    %826 = vmatpush2.bf16.msra.mxu0 0
    %827 = vmatprep.subr.bf16.mxu0 0
    %828 = vmatpush2.bf16.msra.mxu0 0
    %829 = vmatprep.subr.bf16.mxu0 0
    %830 = vmatpush2.bf16.msra.mxu0 0
    %831 = vmatprep.subr.bf16.mxu0 0
    %832 = vmatpush2.bf16.msra.mxu0 0
    %833 = vmatprep.subr.bf16.mxu0 0
    %834 = vmatpush2.bf16.msra.mxu0 0
    %835 = vmatprep.subr.bf16.mxu0 0
    %836 = vmatpush2.bf16.msra.mxu0 0
    %837 = vmatprep.subr.bf16.mxu0 0
    %838 = vmatpush2.bf16.msra.mxu0 0
    %839 = vmatprep.mubr.bf16.mxu0 0
    %840 = vmatmul.mubr.bf16.gmra.mxu0 %v735
    %v841 = vpop.f32.mrf.mxu0
    %v842 = vadd.f32 %v757, %v841
    %v843 = vpop.f32.mrf.mxu0
    %v844 = vpop.f32.mrf.mxu0
    %v845 = vpop.f32.mrf.mxu0
    %846 = vdwg.mxu0
    %v847 = vtanh.pop %v842
    %vm848 = vcmask 64512
    %849 = vst.msk [vmem:[#allocation13] sm:$0xff] %vm848, %v847
    // Predicated region
    $region70: #{tpu_custom_call.1} parent=1 // pred_check
      _
    $region71: #{tpu_custom_call.1} parent=1 // pred_check_branch
      %851 = sbr.rel (0) target = $region73
    $region72: #{tpu_custom_call.1} parent=1 // pred_region
      %s853 = ssub.s32 128, 128
      %854 = vsyncadd [#allocation4], %s853
      %s856 = sshll.u32 [#allocation13], 4
      %s857 = int_to_ptr.vmem [resolvable:$true] %s856
      %859 = dma.vmem_to_hbm [thread:$0]  %s857, 128, %s11, [#allocation4]
    $region73: #{tpu_custom_call.1} parent=1 // pred_fallthru
      _
    // Predicated region
    $region74: #{tpu_custom_call.1} parent=1 // pred_check
      _
    $region75: #{tpu_custom_call.1} parent=1 // pred_check_branch
      %861 = sbr.rel (0) target = $region77
    $region76: #{tpu_custom_call.1} parent=1 // pred_region
      %862 = dma.done [#allocation4], 128
    $region77: #{tpu_custom_call.1} parent=1 // pred_fallthru
      _
    %863 = vsyncpa [#allocation3], 1
    %864 = vsyncpa [#allocation6], 1
    %865 = vsyncpa [#allocation9], 1
    %866 = vsyncpa [#allocation12], 1
    %867 = vsyncpa [#allocation4], 1

// kernel: tpu_custom_call.1
$region0: #{tpu_custom_call.1}
  #allocation0 [shape = 'u32[]', space=smem, size = 0x4, offset = 0x4, fixed_abs, tag = 'smem constant byte address 0x4 - core index']
  #allocation1 [shape = 'u32[144,128]{1,0:T(1,128)}', space=vmem, size = 0x12000, scoped, tag = 'internal scratch']
  %s0 = inlined_call_operand.hbm [shape: f32[8,16], index: 0, kind: input, shape index: {}]
  %s1 = inlined_call_operand.hbm [shape: bf16[16,512], index: 1, kind: input, shape index: {}]
  %s2 = inlined_call_operand.hbm [shape: f32[1,512], index: 2, kind: input, shape index: {}]
  %s3 = inlined_call_operand.vmem [shape: f32[1,512], index: 3, kind: input, shape index: {}]
  %s4 = inlined_call_operand.hbm [shape: f32[1,512], index: 4, kind: input, shape index: {}]
  %s5 = inlined_call_operand.hbm [shape: bf16[512,128], index: 5, kind: input, shape index: {}]
  %s6 = inlined_call_operand.vmem [shape: f32[1,128], index: 6, kind: input, shape index: {}]
  %s7 = inlined_call_operand.vmem [shape: f32[1,128], index: 7, kind: input, shape index: {}]
  %s8 = inlined_call_operand.vmem [shape: f32[1,128], index: 8, kind: input, shape index: {}]
  %s9 = inlined_call_operand.hbm [shape: bf16[128,128], index: 9, kind: input, shape index: {}]
  %s10 = inlined_call_operand.vmem [shape: f32[1,128], index: 10, kind: input, shape index: {}]
  %s11 = inlined_call_operand.hbm [shape: f32[8,8], index: 11, kind: output, shape index: {}]
  %s12 = sld [smem:[#allocation0]]
  $region78: #{tpu_custom_call.1} parent=0
    _
  %s14 = ssub.s32 1, %s12
  %s15 = scalar_select 0, %s14, %s12
  $region1: #{tpu_custom_call.1} parent=0
    #allocation2 [shape = 'u8[4096]{0}', space=vmem, size = 0x1000, scoped, tag = 'input window, operand 0, single buffered']
    #allocation3 [shape = 's32[1]{0}', space=sflag, size = 0x4, scoped, tag = 'scoped memory for tpu_custom_call.1']
    #allocation4 [shape = 's32[1]{0}', space=sflag, size = 0x4, scoped, tag = 'scoped memory for tpu_custom_call.1']
    #allocation5 [shape = 'u8[16384]{0}', space=vmem, size = 0x4000, scoped, tag = 'input window, operand 1, single buffered']
    #allocation6 [shape = 's32[1]{0}', space=sflag, size = 0x4, scoped, tag = 'scoped memory for tpu_custom_call.1']
    #allocation7 [shape = 'u8[2048]{0}', space=vmem, size = 0x800, scoped, tag = 'input window, operand 2, single buffered']
    #allocation8 [shape = 'u8[2048]{0}', space=vmem, size = 0x800, scoped, tag = 'input window, operand 4, single buffered']
    #allocation9 [shape = 's32[1]{0}', space=sflag, size = 0x4, scoped, tag = 'scoped memory for tpu_custom_call.1']
    #allocation10 [shape = 'u8[131072]{0}', space=vmem, size = 0x20000, scoped, tag = 'input window, operand 5, single buffered']
    #allocation11 [shape = 'u8[32768]{0}', space=vmem, size = 0x8000, scoped, tag = 'input window, operand 9, single buffered']
    #allocation12 [shape = 's32[1]{0}', space=sflag, size = 0x4, scoped, tag = 'scoped memory for tpu_custom_call.1']
    #allocation13 [shape = 'u8[4096]{0}', space=vmem, size = 0x1000, scoped, tag = 'output window, operand 0, single buffered']
    %16 = vsyncpa [#allocation3], 0
    %17 = vsyncpa [#allocation6], 0
    %18 = vsyncpa [#allocation9], 0
    %19 = vsyncpa [#allocation12], 0
    %20 = vsyncpa [#allocation4], 0
    // Predicated region
    $region2: #{tpu_custom_call.1} parent=1 // pred_check
      _
    $region3: #{tpu_custom_call.1} parent=1 // pred_check_branch
      %22 = sbr.rel (0) target = $region5
    $region4: #{tpu_custom_call.1} parent=1 // pred_region
      %s24 = ssub.s32 128, 128
      %25 = vsyncadd [#allocation3], %s24
      %s27 = sshll.u32 [#allocation2], 4
      %s28 = int_to_ptr.vmem [resolvable:$true] %s27
      %30 = dma.hbm_to_vmem [thread:$0]  %s0, 128, %s28, [#allocation3]
    $region5: #{tpu_custom_call.1} parent=1 // pred_fallthru
      _
    // Predicated region
    $region6: #{tpu_custom_call.1} parent=1 // pred_check
      _
    $region7: #{tpu_custom_call.1} parent=1 // pred_check_branch
      %32 = sbr.rel (0) target = $region9
    $region8: #{tpu_custom_call.1} parent=1 // pred_region
      %s34 = ssub.s32 512, 512
      %35 = vsyncadd [#allocation6], %s34
      %s36 = sshll.u32 [#allocation5], 4
      %s37 = int_to_ptr.vmem [resolvable:$true] %s36
      %42 = dma.hbm_to_vmem [thread:$0]  %s1, 512, %s37, [#allocation6], 256, 256, 16
    $region9: #{tpu_custom_call.1} parent=1 // pred_fallthru
      _
    // Predicated region
    $region10: #{tpu_custom_call.1} parent=1 // pred_check
      _
    $region11: #{tpu_custom_call.1} parent=1 // pred_check_branch
      %44 = sbr.rel (0) target = $region13
    $region12: #{tpu_custom_call.1} parent=1 // pred_region
      %s46 = ssub.s32 64, 64
      %47 = vsyncadd [#allocation6], %s46
      %s49 = sshll.u32 [#allocation7], 4
      %s50 = int_to_ptr.vmem [resolvable:$true] %s49
      %52 = dma.hbm_to_vmem [thread:$0]  %s2, 64, %s50, [#allocation6]
    $region13: #{tpu_custom_call.1} parent=1 // pred_fallthru
      _
    // Predicated region
    $region14: #{tpu_custom_call.1} parent=1 // pred_check
      _
    $region15: #{tpu_custom_call.1} parent=1 // pred_check_branch
      %54 = sbr.rel (0) target = $region17
    $region16: #{tpu_custom_call.1} parent=1 // pred_region
      _
    $region17: #{tpu_custom_call.1} parent=1 // pred_fallthru
      _
    // Predicated region
    $region18: #{tpu_custom_call.1} parent=1 // pred_check
      _
    $region19: #{tpu_custom_call.1} parent=1 // pred_check_branch
      %56 = sbr.rel (0) target = $region21
    $region20: #{tpu_custom_call.1} parent=1 // pred_region
      %s58 = ssub.s32 64, 64
      %59 = vsyncadd [#allocation9], %s58
      %s61 = sshll.u32 [#allocation8], 4
      %s62 = int_to_ptr.vmem [resolvable:$true] %s61
      %64 = dma.hbm_to_vmem [thread:$0]  %s4, 64, %s62, [#allocation9]
    $region21: #{tpu_custom_call.1} parent=1 // pred_fallthru
      _
    // Predicated region
    $region22: #{tpu_custom_call.1} parent=1 // pred_check
      _
    $region23: #{tpu_custom_call.1} parent=1 // pred_check_branch
      %66 = sbr.rel (0) target = $region25
    $region24: #{tpu_custom_call.1} parent=1 // pred_region
      %s68 = ssub.s32 4096, 4096
      %69 = vsyncadd [#allocation9], %s68
      %s70 = sshll.u32 [#allocation10], 4
      %s71 = int_to_ptr.vmem [resolvable:$true] %s70
      %76 = dma.hbm_to_vmem [thread:$0]  %s5, 4096, %s71, [#allocation9], 64, 64, 4
    $region25: #{tpu_custom_call.1} parent=1 // pred_fallthru
      _
    // Predicated region
    $region26: #{tpu_custom_call.1} parent=1 // pred_check
      _
    $region27: #{tpu_custom_call.1} parent=1 // pred_check_branch
      %78 = sbr.rel (0) target = $region29
    $region28: #{tpu_custom_call.1} parent=1 // pred_region
      _
    $region29: #{tpu_custom_call.1} parent=1 // pred_fallthru
      _
    // Predicated region
    $region30: #{tpu_custom_call.1} parent=1 // pred_check
      _
    $region31: #{tpu_custom_call.1} parent=1 // pred_check_branch
      %80 = sbr.rel (0) target = $region33
    $region32: #{tpu_custom_call.1} parent=1 // pred_region
      _
    $region33: #{tpu_custom_call.1} parent=1 // pred_fallthru
      _
    // Predicated region
    $region34: #{tpu_custom_call.1} parent=1 // pred_check
      _
    $region35: #{tpu_custom_call.1} parent=1 // pred_check_branch
      %82 = sbr.rel (0) target = $region37
    $region36: #{tpu_custom_call.1} parent=1 // pred_region
      _
    $region37: #{tpu_custom_call.1} parent=1 // pred_fallthru
      _
    // Predicated region
    $region38: #{tpu_custom_call.1} parent=1 // pred_check
      _
    $region39: #{tpu_custom_call.1} parent=1 // pred_check_branch
      %84 = sbr.rel (0) target = $region41
    $region40: #{tpu_custom_call.1} parent=1 // pred_region
      %s86 = ssub.s32 1024, 1024
      %87 = vsyncadd [#allocation12], %s86
      %s88 = sshll.u32 [#allocation11], 4
      %s89 = int_to_ptr.vmem [resolvable:$true] %s88
      %94 = dma.hbm_to_vmem [thread:$0]  %s9, 1024, %s89, [#allocation12], 64, 64, 4
    $region41: #{tpu_custom_call.1} parent=1 // pred_fallthru
      _
    // Predicated region
    $region42: #{tpu_custom_call.1} parent=1 // pred_check
      _
    $region43: #{tpu_custom_call.1} parent=1 // pred_check_branch
      %96 = sbr.rel (0) target = $region45
    $region44: #{tpu_custom_call.1} parent=1 // pred_region
      _
    $region45: #{tpu_custom_call.1} parent=1 // pred_fallthru
      _
    // Predicated region
    $region46: #{tpu_custom_call.1} parent=1 // pred_check
      _
    $region47: #{tpu_custom_call.1} parent=1 // pred_check_branch
      %98 = sbr.rel (0) target = $region49
    $region48: #{tpu_custom_call.1} parent=1 // pred_region
      %99 = dma.done [#allocation3], 128
    $region49: #{tpu_custom_call.1} parent=1 // pred_fallthru
      _
    // Predicated region
    $region50: #{tpu_custom_call.1} parent=1 // pred_check
      _
    $region51: #{tpu_custom_call.1} parent=1 // pred_check_branch
      %101 = sbr.rel (0) target = $region53
    $region52: #{tpu_custom_call.1} parent=1 // pred_region
      %102 = dma.done [#allocation6], 512
    $region53: #{tpu_custom_call.1} parent=1 // pred_fallthru
      _
    // Predicated region
    $region54: #{tpu_custom_call.1} parent=1 // pred_check
      _
    $region55: #{tpu_custom_call.1} parent=1 // pred_check_branch
      %104 = sbr.rel (0) target = $region57
    $region56: #{tpu_custom_call.1} parent=1 // pred_region
      %105 = dma.done [#allocation6], 64
    $region57: #{tpu_custom_call.1} parent=1 // pred_fallthru
      _
    // Predicated region
    $region58: #{tpu_custom_call.1} parent=1 // pred_check
      _
    $region59: #{tpu_custom_call.1} parent=1 // pred_check_branch
      %107 = sbr.rel (0) target = $region61
    $region60: #{tpu_custom_call.1} parent=1 // pred_region
      %108 = dma.done [#allocation9], 64
    $region61: #{tpu_custom_call.1} parent=1 // pred_fallthru
      _
    // Predicated region
    $region62: #{tpu_custom_call.1} parent=1 // pred_check
      _
    $region63: #{tpu_custom_call.1} parent=1 // pred_check_branch
      %110 = sbr.rel (0) target = $region65
    $region64: #{tpu_custom_call.1} parent=1 // pred_region
      %111 = dma.done [#allocation9], 4096
    $region65: #{tpu_custom_call.1} parent=1 // pred_fallthru
      _
    // Predicated region
    $region66: #{tpu_custom_call.1} parent=1 // pred_check
      _
    $region67: #{tpu_custom_call.1} parent=1 // pred_check_branch
      %113 = sbr.rel (0) target = $region69
    $region68: #{tpu_custom_call.1} parent=1 // pred_region
      %114 = dma.done [#allocation12], 1024
    $region69: #{tpu_custom_call.1} parent=1 // pred_fallthru
      _
    %v116 = vld [vmem:[#allocation2] sm:$0xff]
    %v117 = vpack.c.bf16 %v116, %v116
    %v118 = vld [vmem:[#allocation5] sm:$0xff]
    %v119 = vld [vmem:[#allocation5 + $0x8] sm:$0xff]
    %v120 = vld [vmem:[#allocation5 + $0x10] sm:$0xff]
    %v121 = vld [vmem:[#allocation5 + $0x18] sm:$0xff]
    %v122 = vld [vmem:[#allocation7] sm:$0xf]
    %v124 = vlaneseq
    %v125 = vshrl.u32 %v124, 7
    %v126 = vsub.s32 0, %v125
    %v127 = vrot.slane %v122, %v126
    %v128 = vlaneseq
    %v129 = vshrl.u32 %v128, 7
    %v130 = vsub.s32 1, %v129
    %v131 = vrot.slane %v122, %v130
    %v132 = vlaneseq
    %v133 = vshrl.u32 %v132, 7
    %v134 = vsub.s32 2, %v133
    %v135 = vrot.slane %v122, %v134
    %v136 = vlaneseq
    %v137 = vshrl.u32 %v136, 7
    %v138 = vsub.s32 3, %v137
    %v139 = vrot.slane %v122, %v138
    %v148 = vunpack.c.l.b16 %v118
    %v149 = vunpack.c.h.b16 %v118
    %v150 = vunpack.c.l.b16 %v119
    %v151 = vunpack.c.h.b16 %v119
    %v152 = vunpack.c.l.b16 %v120
    %v153 = vunpack.c.h.b16 %v120
    %v154 = vunpack.c.l.b16 %v121
    %v155 = vunpack.c.h.b16 %v121
    %v156 = vpack.c.b16 %v152, %v148
    %v157 = vpack.c.b16 %v153, %v149
    %v158 = vpack.c.b16 %v154, %v150
    %v159 = vpack.c.b16 %v155, %v151
    %vm164 = vcmask 130048
    %v166 = vsel %vm164, %v117, 0
    %168 = vmatprep.subr.bf16.mxu0 0
    %169 = vmatpush1.bf16.msra.mxu0 0
    %170 = vmatprep.subr.bf16.mxu0 0
    %171 = vmatpush1.bf16.msra.mxu0 0
    %172 = vmatprep.subr.bf16.mxu0 0
    %173 = vmatpush1.bf16.msra.mxu0 0
    %174 = vmatprep.subr.bf16.mxu0 0
    %175 = vmatpush1.bf16.msra.mxu0 0
    %176 = vmatprep.subr.bf16.mxu0 0
    %177 = vmatpush1.bf16.msra.mxu0 0
    %178 = vmatprep.subr.bf16.mxu0 0
    %179 = vmatpush1.bf16.msra.mxu0 0
    %180 = vmatprep.subr.bf16.mxu0 0
    %181 = vmatpush1.bf16.msra.mxu0 0
    %182 = vmatprep.subr.bf16.mxu0 %v157
    %183 = vmatpush1.bf16.msra.mxu0 %v156
    %184 = vmatprep.subr.bf16.mxu0 0
    %185 = vmatpush2.bf16.msra.mxu0 0
    %186 = vmatprep.subr.bf16.mxu0 0
    %187 = vmatpush2.bf16.msra.mxu0 0
    %188 = vmatprep.subr.bf16.mxu0 0
    %189 = vmatpush2.bf16.msra.mxu0 0
    %190 = vmatprep.subr.bf16.mxu0 0
    %191 = vmatpush2.bf16.msra.mxu0 0
    %192 = vmatprep.subr.bf16.mxu0 0
    %193 = vmatpush2.bf16.msra.mxu0 0
    %194 = vmatprep.subr.bf16.mxu0 0
    %195 = vmatpush2.bf16.msra.mxu0 0
    %196 = vmatprep.subr.bf16.mxu0 0
    %197 = vmatpush2.bf16.msra.mxu0 0
    %198 = vmatprep.subr.bf16.mxu0 0
    %199 = vmatpush2.bf16.msra.mxu0 0
    %200 = vmatprep.mubr.bf16.mxu0 0
    %201 = vmatmul.mubr.bf16.gmra.mxu0 %v166
    %v202 = vpop.f32.mrf.mxu0
    %v203 = vadd.f32 %v127, %v202
    %v204 = vpop.f32.mrf.mxu0
    %v205 = vadd.f32 %v131, %v204
    %v206 = vpop.f32.mrf.mxu0
    %v207 = vpop.f32.mrf.mxu0
    %208 = vdwg.mxu0
    %209 = vmatprep.subr.bf16.mxu0 0
    %210 = vmatpush1.bf16.msra.mxu0 0
    %211 = vmatprep.subr.bf16.mxu0 0
    %212 = vmatpush1.bf16.msra.mxu0 0
    %213 = vmatprep.subr.bf16.mxu0 0
    %214 = vmatpush1.bf16.msra.mxu0 0
    %215 = vmatprep.subr.bf16.mxu0 0
    %216 = vmatpush1.bf16.msra.mxu0 0
    %217 = vmatprep.subr.bf16.mxu0 0
    %218 = vmatpush1.bf16.msra.mxu0 0
    %219 = vmatprep.subr.bf16.mxu0 0
    %220 = vmatpush1.bf16.msra.mxu0 0
    %221 = vmatprep.subr.bf16.mxu0 0
    %222 = vmatpush1.bf16.msra.mxu0 0
    %223 = vmatprep.subr.bf16.mxu0 %v159
    %224 = vmatpush1.bf16.msra.mxu0 %v158
    %225 = vmatprep.subr.bf16.mxu0 0
    %226 = vmatpush2.bf16.msra.mxu0 0
    %227 = vmatprep.subr.bf16.mxu0 0
    %228 = vmatpush2.bf16.msra.mxu0 0
    %229 = vmatprep.subr.bf16.mxu0 0
    %230 = vmatpush2.bf16.msra.mxu0 0
    %231 = vmatprep.subr.bf16.mxu0 0
    %232 = vmatpush2.bf16.msra.mxu0 0
    %233 = vmatprep.subr.bf16.mxu0 0
    %234 = vmatpush2.bf16.msra.mxu0 0
    %235 = vmatprep.subr.bf16.mxu0 0
    %236 = vmatpush2.bf16.msra.mxu0 0
    %237 = vmatprep.subr.bf16.mxu0 0
    %238 = vmatpush2.bf16.msra.mxu0 0
    %239 = vmatprep.subr.bf16.mxu0 0
    %240 = vmatpush2.bf16.msra.mxu0 0
    %241 = vmatprep.mubr.bf16.mxu0 0
    %242 = vmatmul.mubr.bf16.gmra.mxu0 %v166
    %v243 = vpop.f32.mrf.mxu0
    %v244 = vadd.f32 %v135, %v243
    %v245 = vpop.f32.mrf.mxu0
    %v246 = vadd.f32 %v139, %v245
    %v247 = vpop.f32.mrf.mxu0
    %v248 = vpop.f32.mrf.mxu0
    %249 = vdwg.mxu0
    %v250 = vld [vmem:[%s3] sm:$0xf]
    %v251 = vld [vmem:[#allocation8] sm:$0xf]
    %v252 = vadd.f32 %v203, %v205
    %v253 = vadd.f32 %v252, %v244
    %v254 = vadd.f32 %v253, %v246
    %255 = vadd.xlane.f32.xlu0 %v254
    %v256 = vpop.xlane.xlu0 %255
    %v257 = vmul.f32 %v256, 0.0025
    %v258 = vsub.f32 %v203, %v257
    %v259 = vsub.f32 %v205, %v257
    %v260 = vsub.f32 %v244, %v257
    %v261 = vsub.f32 %v246, %v257
    %v262 = vmul.f32 %v258, %v258
    %v263 = vmul.f32 %v259, %v259
    %v264 = vmul.f32 %v260, %v260
    %v265 = vmul.f32 %v261, %v261
    %v266 = vadd.f32 %v262, %v263
    %v267 = vadd.f32 %v266, %v264
    %v268 = vadd.f32 %v267, %v265
    %269 = vadd.xlane.f32.xlu0 %v268
    %v270 = vpop.xlane.xlu0 %269
    %v271 = vmul.f32 %v257, %v257
    %v272 = vmul.f32 %v271, 112.0
    %v273 = vsub.f32 %v270, %v272
    %v274 = vmul.f32 %v273, 0.0025062656
    %v275 = vmax.f32 %v274, 0.0
    %v276 = vrsqrt.pop %v275
    %v277 = vmul.f32 %v275, %v276
    %vm278 = vcmp.eq.f32.partialorder %v275, inf
    %v279 = vsel %vm278, %v275, %v277
    %vm280 = vcmp.eq.f32.partialorder %v275, 0.0
    %v281 = vand.u32 %v275, 2147483648
    %v282 = vsel %vm280, %v281, %v279
    %v283 = vadd.f32 %v282, 1e-06
    %v284 = vrcp.pop %v283
    %v285 = vmul.f32 %v283, %v284
    %v286 = vsub.f32 2.0, %v285
    %v287 = vmul.f32 %v284, %v286
    %v288 = vmul.f32 %v258, %v287
    %v289 = vmul.f32 %v259, %v287
    %v290 = vmul.f32 %v260, %v287
    %v291 = vmul.f32 %v261, %v287
    %v293 = vlaneseq
    %v294 = vshrl.u32 %v293, 7
    %v295 = vsub.s32 0, %v294
    %v296 = vrot.slane %v250, %v295
    %v297 = vlaneseq
    %v298 = vshrl.u32 %v297, 7
    %v299 = vsub.s32 1, %v298
    %v300 = vrot.slane %v250, %v299
    %v301 = vlaneseq
    %v302 = vshrl.u32 %v301, 7
    %v303 = vsub.s32 2, %v302
    %v304 = vrot.slane %v250, %v303
    %v305 = vlaneseq
    %v306 = vshrl.u32 %v305, 7
    %v307 = vsub.s32 3, %v306
    %v308 = vrot.slane %v250, %v307
    %v313 = vmul.f32 %v296, %v288
    %v314 = vmul.f32 %v300, %v289
    %v315 = vmul.f32 %v304, %v290
    %v316 = vmul.f32 %v308, %v291
    %v318 = vlaneseq
    %v319 = vshrl.u32 %v318, 7
    %v320 = vsub.s32 0, %v319
    %v321 = vrot.slane %v251, %v320
    %v322 = vlaneseq
    %v323 = vshrl.u32 %v322, 7
    %v324 = vsub.s32 1, %v323
    %v325 = vrot.slane %v251, %v324
    %v326 = vlaneseq
    %v327 = vshrl.u32 %v326, 7
    %v328 = vsub.s32 2, %v327
    %v329 = vrot.slane %v251, %v328
    %v330 = vlaneseq
    %v331 = vshrl.u32 %v330, 7
    %v332 = vsub.s32 3, %v331
    %v333 = vrot.slane %v251, %v332
    %v338 = vadd.f32 %v313, %v321
    %v339 = vadd.f32 %v314, %v325
    %v340 = vadd.f32 %v315, %v329
    %v341 = vadd.f32 %v316, %v333
    %v342 = vtanh.pop %v338
    %v343 = vtanh.pop %v339
    %v344 = vtanh.pop %v340
    %v345 = vtanh.pop %v341
    %v346 = vpack.c.bf16 %v342, %v342
    %v347 = vpack.c.bf16 %v343, %v343
    %v348 = vpack.c.bf16 %v344, %v344
    %v349 = vpack.c.bf16 %v345, %v345
    %v350 = vld [vmem:[#allocation10] sm:$0xf]
    %v351 = vld [vmem:[#allocation10 + $0x4] sm:$0xf]
    %v352 = vld [vmem:[#allocation10 + $0x8] sm:$0xf]
    %v353 = vld [vmem:[#allocation10 + $0xc] sm:$0xf]
    %v354 = vld [vmem:[#allocation10 + $0x10] sm:$0xf]
    %v355 = vld [vmem:[#allocation10 + $0x14] sm:$0xf]
    %v356 = vld [vmem:[#allocation10 + $0x18] sm:$0xf]
    %v357 = vld [vmem:[#allocation10 + $0x1c] sm:$0xf]
    %v358 = vld [vmem:[#allocation10 + $0x20] sm:$0xf]
    %v359 = vld [vmem:[#allocation10 + $0x24] sm:$0xf]
    %v360 = vld [vmem:[#allocation10 + $0x28] sm:$0xf]
    %v361 = vld [vmem:[#allocation10 + $0x2c] sm:$0xf]
    %v362 = vld [vmem:[#allocation10 + $0x30] sm:$0xf]
    %v363 = vld [vmem:[#allocation10 + $0x34] sm:$0xf]
    %v364 = vld [vmem:[#allocation10 + $0x38] sm:$0xf]
    %v365 = vld [vmem:[#allocation10 + $0x3c] sm:$0xf]
    %v366 = vld [vmem:[#allocation10 + $0x40] sm:$0xf]
    %v367 = vld [vmem:[#allocation10 + $0x44] sm:$0xf]
    %v368 = vld [vmem:[#allocation10 + $0x48] sm:$0xf]
    %v369 = vld [vmem:[#allocation10 + $0x4c] sm:$0xf]
    %v370 = vld [vmem:[#allocation10 + $0x50] sm:$0xf]
    %v371 = vld [vmem:[#allocation10 + $0x54] sm:$0xf]
    %v372 = vld [vmem:[#allocation10 + $0x58] sm:$0xf]
    %v373 = vld [vmem:[#allocation10 + $0x5c] sm:$0xf]
    %v374 = vld [vmem:[#allocation10 + $0x60] sm:$0xf]
    %v375 = vld [vmem:[#allocation10 + $0x64] sm:$0xf]
    %v376 = vld [vmem:[#allocation10 + $0x68] sm:$0xf]
    %v377 = vld [vmem:[#allocation10 + $0x6c] sm:$0xf]
    %v378 = vld [vmem:[#allocation10 + $0x70] sm:$0xf]
    %v379 = vld [vmem:[#allocation10 + $0x74] sm:$0xf]
    %v380 = vld [vmem:[#allocation10 + $0x78] sm:$0xf]
    %v381 = vld [vmem:[#allocation10 + $0x7c] sm:$0xf]
    %v382 = vld [vmem:[#allocation10 + $0x80] sm:$0xf]
    %v383 = vld [vmem:[#allocation10 + $0x84] sm:$0xf]
    %v384 = vld [vmem:[#allocation10 + $0x88] sm:$0xf]
    %v385 = vld [vmem:[#allocation10 + $0x8c] sm:$0xf]
    %v386 = vld [vmem:[#allocation10 + $0x90] sm:$0xf]
    %v387 = vld [vmem:[#allocation10 + $0x94] sm:$0xf]
    %v388 = vld [vmem:[#allocation10 + $0x98] sm:$0xf]
    %v389 = vld [vmem:[#allocation10 + $0x9c] sm:$0xf]
    %v390 = vld [vmem:[#allocation10 + $0xa0] sm:$0xf]
    %v391 = vld [vmem:[#allocation10 + $0xa4] sm:$0xf]
    %v392 = vld [vmem:[#allocation10 + $0xa8] sm:$0xf]
    %v393 = vld [vmem:[#allocation10 + $0xac] sm:$0xf]
    %v394 = vld [vmem:[#allocation10 + $0xb0] sm:$0xf]
    %v395 = vld [vmem:[#allocation10 + $0xb4] sm:$0xf]
    %v396 = vld [vmem:[#allocation10 + $0xb8] sm:$0xf]
    %v397 = vld [vmem:[#allocation10 + $0xbc] sm:$0xf]
    %v398 = vld [vmem:[#allocation10 + $0xc0] sm:$0xf]
    %v399 = vld [vmem:[#allocation10 + $0xc4] sm:$0xf]
    %v400 = vld [vmem:[#allocation10 + $0xc8] sm:$0xf]
    %v401 = vld [vmem:[#allocation10 + $0xcc] sm:$0xf]
    %v402 = vld [vmem:[#allocation10 + $0xd0] sm:$0xf]
    %v403 = vld [vmem:[#allocation10 + $0xd4] sm:$0xf]
    %v404 = vld [vmem:[#allocation10 + $0xd8] sm:$0xf]
    %v405 = vld [vmem:[#allocation10 + $0xdc] sm:$0xf]
    %v406 = vld [vmem:[#allocation10 + $0xe0] sm:$0xf]
    %v407 = vld [vmem:[#allocation10 + $0xe4] sm:$0xf]
    %v408 = vld [vmem:[#allocation10 + $0xe8] sm:$0xf]
    %v409 = vld [vmem:[#allocation10 + $0xec] sm:$0xf]
    %v410 = vld [vmem:[#allocation10 + $0xf0] sm:$0xf]
    %v411 = vld [vmem:[#allocation10 + $0xf4] sm:$0xf]
    %v412 = vld [vmem:[#allocation10 + $0xf8] sm:$0xf]
    %v413 = vld [vmem:[#allocation10 + $0xfc] sm:$0xf]
    %v414 = vld [vmem:[%s6] sm:$0x1]
    %v416 = vlaneseq
    %v417 = vshrl.u32 %v416, 7
    %v418 = vsub.s32 0, %v417
    %v419 = vrot.slane %v414, %v418
    %v485 = vunpack.c.l.b16 %v350
    %v486 = vunpack.c.l.b16 %v351
    %v487 = vunpack.c.l.b16 %v352
    %v488 = vunpack.c.l.b16 %v353
    %v489 = vunpack.c.l.b16 %v354
    %v490 = vunpack.c.l.b16 %v355
    %v491 = vunpack.c.l.b16 %v356
    %v492 = vunpack.c.l.b16 %v357
    %v493 = vunpack.c.l.b16 %v358
    %v494 = vunpack.c.l.b16 %v359
    %v495 = vunpack.c.l.b16 %v360
    %v496 = vunpack.c.l.b16 %v361
    %v497 = vunpack.c.l.b16 %v362
    %v498 = vunpack.c.l.b16 %v363
    %v499 = vunpack.c.l.b16 %v364
    %v500 = vunpack.c.l.b16 %v365
    %v501 = vunpack.c.l.b16 %v366
    %v502 = vunpack.c.l.b16 %v367
    %v503 = vunpack.c.l.b16 %v368
    %v504 = vunpack.c.l.b16 %v369
    %v505 = vunpack.c.l.b16 %v370
    %v506 = vunpack.c.l.b16 %v371
    %v507 = vunpack.c.l.b16 %v372
    %v508 = vunpack.c.l.b16 %v373
    %v509 = vunpack.c.l.b16 %v374
    %v510 = vunpack.c.l.b16 %v375
    %v511 = vunpack.c.l.b16 %v376
    %v512 = vunpack.c.l.b16 %v377
    %v513 = vunpack.c.l.b16 %v378
    %v514 = vunpack.c.l.b16 %v379
    %v515 = vunpack.c.l.b16 %v380
    %v516 = vunpack.c.l.b16 %v381
    %v517 = vunpack.c.l.b16 %v382
    %v518 = vunpack.c.l.b16 %v383
    %v519 = vunpack.c.l.b16 %v384
    %v520 = vunpack.c.l.b16 %v385
    %v521 = vunpack.c.l.b16 %v386
    %v522 = vunpack.c.l.b16 %v387
    %v523 = vunpack.c.l.b16 %v388
    %v524 = vunpack.c.l.b16 %v389
    %v525 = vunpack.c.l.b16 %v390
    %v526 = vunpack.c.l.b16 %v391
    %v527 = vunpack.c.l.b16 %v392
    %v528 = vunpack.c.l.b16 %v393
    %v529 = vunpack.c.l.b16 %v394
    %v530 = vunpack.c.l.b16 %v395
    %v531 = vunpack.c.l.b16 %v396
    %v532 = vunpack.c.l.b16 %v397
    %v533 = vunpack.c.l.b16 %v398
    %v534 = vunpack.c.l.b16 %v399
    %v535 = vunpack.c.l.b16 %v400
    %v536 = vunpack.c.l.b16 %v401
    %v537 = vunpack.c.l.b16 %v402
    %v538 = vunpack.c.l.b16 %v403
    %v539 = vunpack.c.l.b16 %v404
    %v540 = vunpack.c.l.b16 %v405
    %v541 = vunpack.c.l.b16 %v406
    %v542 = vunpack.c.l.b16 %v407
    %v543 = vunpack.c.l.b16 %v408
    %v544 = vunpack.c.l.b16 %v409
    %v545 = vunpack.c.l.b16 %v410
    %v546 = vunpack.c.l.b16 %v411
    %v547 = vunpack.c.l.b16 %v412
    %v548 = vunpack.c.l.b16 %v413
    %v549 = vpack.c.b16 %v486, %v485
    %v550 = vpack.c.b16 %v488, %v487
    %v551 = vpack.c.b16 %v490, %v489
    %v552 = vpack.c.b16 %v492, %v491
    %v553 = vpack.c.b16 %v494, %v493
    %v554 = vpack.c.b16 %v496, %v495
    %v555 = vpack.c.b16 %v498, %v497
    %v556 = vpack.c.b16 %v500, %v499
    %v557 = vpack.c.b16 %v502, %v501
    %v558 = vpack.c.b16 %v504, %v503
    %v559 = vpack.c.b16 %v506, %v505
    %v560 = vpack.c.b16 %v508, %v507
    %v561 = vpack.c.b16 %v510, %v509
    %v562 = vpack.c.b16 %v512, %v511
    %v563 = vpack.c.b16 %v514, %v513
    %v564 = vpack.c.b16 %v516, %v515
    %v565 = vpack.c.b16 %v518, %v517
    %v566 = vpack.c.b16 %v520, %v519
    %v567 = vpack.c.b16 %v522, %v521
    %v568 = vpack.c.b16 %v524, %v523
    %v569 = vpack.c.b16 %v526, %v525
    %v570 = vpack.c.b16 %v528, %v527
    %v571 = vpack.c.b16 %v530, %v529
    %v572 = vpack.c.b16 %v532, %v531
    %v573 = vpack.c.b16 %v534, %v533
    %v574 = vpack.c.b16 %v536, %v535
    %v575 = vpack.c.b16 %v538, %v537
    %v576 = vpack.c.b16 %v540, %v539
    %v577 = vpack.c.b16 %v542, %v541
    %v578 = vpack.c.b16 %v544, %v543
    %v579 = vpack.c.b16 %v546, %v545
    %v580 = vpack.c.b16 %v548, %v547
    %613 = vmatprep.subr.bf16.mxu0 0
    %614 = vmatpush1.bf16.msra.mxu0 %v556
    %615 = vmatprep.subr.bf16.mxu0 0
    %616 = vmatpush1.bf16.msra.mxu0 %v555
    %617 = vmatprep.subr.bf16.mxu0 0
    %618 = vmatpush1.bf16.msra.mxu0 %v554
    %619 = vmatprep.subr.bf16.mxu0 0
    %620 = vmatpush1.bf16.msra.mxu0 %v553
    %621 = vmatprep.subr.bf16.mxu0 0
    %622 = vmatpush1.bf16.msra.mxu0 %v552
    %623 = vmatprep.subr.bf16.mxu0 0
    %624 = vmatpush1.bf16.msra.mxu0 %v551
    %625 = vmatprep.subr.bf16.mxu0 0
    %626 = vmatpush1.bf16.msra.mxu0 %v550
    %627 = vmatprep.subr.bf16.mxu0 0
    %628 = vmatpush1.bf16.msra.mxu0 %v549
    %629 = vmatprep.subr.bf16.mxu0 0
    %630 = vmatpush2.bf16.msra.mxu0 %v564
    %631 = vmatprep.subr.bf16.mxu0 0
    %632 = vmatpush2.bf16.msra.mxu0 %v563
    %633 = vmatprep.subr.bf16.mxu0 0
    %634 = vmatpush2.bf16.msra.mxu0 %v562
    %635 = vmatprep.subr.bf16.mxu0 0
    %636 = vmatpush2.bf16.msra.mxu0 %v561
    %637 = vmatprep.subr.bf16.mxu0 0
    %638 = vmatpush2.bf16.msra.mxu0 %v560
    %639 = vmatprep.subr.bf16.mxu0 0
    %640 = vmatpush2.bf16.msra.mxu0 %v559
    %641 = vmatprep.subr.bf16.mxu0 0
    %642 = vmatpush2.bf16.msra.mxu0 %v558
    %643 = vmatprep.subr.bf16.mxu0 0
    %644 = vmatpush2.bf16.msra.mxu0 %v557
    %645 = vmatprep.mubr.bf16.mxu0 %v347
    %646 = vmatmul.mubr.bf16.gmra.mxu0 %v346
    %v647 = vpop.f32.mrf.mxu0
    %v648 = vadd.f32 %v419, %v647
    %v649 = vpop.f32.mrf.mxu0
    %v650 = vpop.f32.mrf.mxu0
    %v651 = vpop.f32.mrf.mxu0
    %652 = vdwg.mxu0
    %653 = vmatprep.subr.bf16.mxu0 0
    %654 = vmatpush1.bf16.msra.mxu0 %v572
    %655 = vmatprep.subr.bf16.mxu0 0
    %656 = vmatpush1.bf16.msra.mxu0 %v571
    %657 = vmatprep.subr.bf16.mxu0 0
    %658 = vmatpush1.bf16.msra.mxu0 %v570
    %659 = vmatprep.subr.bf16.mxu0 0
    %660 = vmatpush1.bf16.msra.mxu0 %v569
    %661 = vmatprep.subr.bf16.mxu0 0
    %662 = vmatpush1.bf16.msra.mxu0 %v568
    %663 = vmatprep.subr.bf16.mxu0 0
    %664 = vmatpush1.bf16.msra.mxu0 %v567
    %665 = vmatprep.subr.bf16.mxu0 0
    %666 = vmatpush1.bf16.msra.mxu0 %v566
    %667 = vmatprep.subr.bf16.mxu0 0
    %668 = vmatpush1.bf16.msra.mxu0 %v565
    %669 = vmatprep.subr.bf16.mxu0 0
    %670 = vmatpush2.bf16.msra.mxu0 %v580
    %671 = vmatprep.subr.bf16.mxu0 0
    %672 = vmatpush2.bf16.msra.mxu0 %v579
    %673 = vmatprep.subr.bf16.mxu0 0
    %674 = vmatpush2.bf16.msra.mxu0 %v578
    %675 = vmatprep.subr.bf16.mxu0 0
    %676 = vmatpush2.bf16.msra.mxu0 %v577
    %677 = vmatprep.subr.bf16.mxu0 0
    %678 = vmatpush2.bf16.msra.mxu0 %v576
    %679 = vmatprep.subr.bf16.mxu0 0
    %680 = vmatpush2.bf16.msra.mxu0 %v575
    %681 = vmatprep.subr.bf16.mxu0 0
    %682 = vmatpush2.bf16.msra.mxu0 %v574
    %683 = vmatprep.subr.bf16.mxu0 0
    %684 = vmatpush2.bf16.msra.mxu0 %v573
    %685 = vmatprep.mubr.bf16.mxu0 %v349
    %686 = vmatmul.mubr.bf16.gmra.mxu0 %v348
    %v687 = vpop.f32.mrf.mxu0
    %v688 = vadd.f32 %v648, %v687
    %v689 = vpop.f32.mrf.mxu0
    %v690 = vpop.f32.mrf.mxu0
    %v691 = vpop.f32.mrf.mxu0
    %692 = vdwg.mxu0
    %v693 = vld [vmem:[%s7] sm:$0x1]
    %v694 = vld [vmem:[%s8] sm:$0x1]
    %695 = vadd.xlane.f32.xlu0 %v688
    %v696 = vpop.xlane.xlu0 %695
    %v697 = vmul.f32 %v696, 0.03125
    %v698 = vsub.f32 %v688, %v697
    %v699 = vmul.f32 %v698, %v698
    %700 = vadd.xlane.f32.xlu0 %v699
    %v701 = vpop.xlane.xlu0 %700
    %v702 = vmul.f32 %v697, %v697
    %v703 = vmul.f32 %v702, 96.0
    %v704 = vsub.f32 %v701, %v703
    %v705 = vmul.f32 %v704, 0.032258064
    %v706 = vmax.f32 %v705, 0.0
    %v707 = vrsqrt.pop %v706
    %v708 = vmul.f32 %v706, %v707
    %vm709 = vcmp.eq.f32.partialorder %v706, inf
    %v710 = vsel %vm709, %v706, %v708
    %vm711 = vcmp.eq.f32.partialorder %v706, 0.0
    %v712 = vand.u32 %v706, 2147483648
    %v713 = vsel %vm711, %v712, %v710
    %v714 = vadd.f32 %v713, 1e-06
    %v715 = vrcp.pop %v714
    %v716 = vmul.f32 %v714, %v715
    %v717 = vsub.f32 2.0, %v716
    %v718 = vmul.f32 %v715, %v717
    %v719 = vmul.f32 %v698, %v718
    %v721 = vlaneseq
    %v722 = vshrl.u32 %v721, 7
    %v723 = vsub.s32 0, %v722
    %v724 = vrot.slane %v693, %v723
    %v726 = vmul.f32 %v724, %v719
    %v728 = vlaneseq
    %v729 = vshrl.u32 %v728, 7
    %v730 = vsub.s32 0, %v729
    %v731 = vrot.slane %v694, %v730
    %v733 = vadd.f32 %v726, %v731
    %v734 = vtanh.pop %v733
    %v735 = vpack.c.bf16 %v734, %v734
    %v736 = vld [vmem:[#allocation11] sm:$0xf]
    %v737 = vld [vmem:[#allocation11 + $0x4] sm:$0xf]
    %v738 = vld [vmem:[#allocation11 + $0x8] sm:$0xf]
    %v739 = vld [vmem:[#allocation11 + $0xc] sm:$0xf]
    %v740 = vld [vmem:[#allocation11 + $0x10] sm:$0xf]
    %v741 = vld [vmem:[#allocation11 + $0x14] sm:$0xf]
    %v742 = vld [vmem:[#allocation11 + $0x18] sm:$0xf]
    %v743 = vld [vmem:[#allocation11 + $0x1c] sm:$0xf]
    %v744 = vld [vmem:[#allocation11 + $0x20] sm:$0xf]
    %v745 = vld [vmem:[#allocation11 + $0x24] sm:$0xf]
    %v746 = vld [vmem:[#allocation11 + $0x28] sm:$0xf]
    %v747 = vld [vmem:[#allocation11 + $0x2c] sm:$0xf]
    %v748 = vld [vmem:[#allocation11 + $0x30] sm:$0xf]
    %v749 = vld [vmem:[#allocation11 + $0x34] sm:$0xf]
    %v750 = vld [vmem:[#allocation11 + $0x38] sm:$0xf]
    %v751 = vld [vmem:[#allocation11 + $0x3c] sm:$0xf]
    %v752 = vld [vmem:[%s10] sm:$0x1]
    %v754 = vlaneseq
    %v755 = vshrl.u32 %v754, 7
    %v756 = vsub.s32 0, %v755
    %v757 = vrot.slane %v752, %v756
    %v775 = vunpack.c.l.b16 %v736
    %v776 = vunpack.c.l.b16 %v737
    %v777 = vunpack.c.l.b16 %v738
    %v778 = vunpack.c.l.b16 %v739
    %v779 = vunpack.c.l.b16 %v740
    %v780 = vunpack.c.l.b16 %v741
    %v781 = vunpack.c.l.b16 %v742
    %v782 = vunpack.c.l.b16 %v743
    %v783 = vunpack.c.l.b16 %v744
    %v784 = vunpack.c.l.b16 %v745
    %v785 = vunpack.c.l.b16 %v746
    %v786 = vunpack.c.l.b16 %v747
    %v787 = vunpack.c.l.b16 %v748
    %v788 = vunpack.c.l.b16 %v749
    %v789 = vunpack.c.l.b16 %v750
    %v790 = vunpack.c.l.b16 %v751
    %v791 = vpack.c.b16 %v776, %v775
    %v792 = vpack.c.b16 %v778, %v777
    %v793 = vpack.c.b16 %v780, %v779
    %v794 = vpack.c.b16 %v782, %v781
    %v795 = vpack.c.b16 %v784, %v783
    %v796 = vpack.c.b16 %v786, %v785
    %v797 = vpack.c.b16 %v788, %v787
    %v798 = vpack.c.b16 %v790, %v789
    %807 = vmatprep.subr.bf16.mxu0 0
    %808 = vmatpush1.bf16.msra.mxu0 %v798
    %809 = vmatprep.subr.bf16.mxu0 0
    %810 = vmatpush1.bf16.msra.mxu0 %v797
    %811 = vmatprep.subr.bf16.mxu0 0
    %812 = vmatpush1.bf16.msra.mxu0 %v796
    %813 = vmatprep.subr.bf16.mxu0 0
    %814 = vmatpush1.bf16.msra.mxu0 %v795
    %815 = vmatprep.subr.bf16.mxu0 0
    %816 = vmatpush1.bf16.msra.mxu0 %v794
    %817 = vmatprep.subr.bf16.mxu0 0
    %818 = vmatpush1.bf16.msra.mxu0 %v793
    %819 = vmatprep.subr.bf16.mxu0 0
    %820 = vmatpush1.bf16.msra.mxu0 %v792
    %821 = vmatprep.subr.bf16.mxu0 0
    %822 = vmatpush1.bf16.msra.mxu0 %v791
    %823 = vmatprep.subr.bf16.mxu0 0
    %824 = vmatpush2.bf16.msra.mxu0 0
    %825 = vmatprep.subr.bf16.mxu0 0
    %826 = vmatpush2.bf16.msra.mxu0 0
    %827 = vmatprep.subr.bf16.mxu0 0
    %828 = vmatpush2.bf16.msra.mxu0 0
    %829 = vmatprep.subr.bf16.mxu0 0
    %830 = vmatpush2.bf16.msra.mxu0 0
    %831 = vmatprep.subr.bf16.mxu0 0
    %832 = vmatpush2.bf16.msra.mxu0 0
    %833 = vmatprep.subr.bf16.mxu0 0
    %834 = vmatpush2.bf16.msra.mxu0 0
    %835 = vmatprep.subr.bf16.mxu0 0
    %836 = vmatpush2.bf16.msra.mxu0 0
    %837 = vmatprep.subr.bf16.mxu0 0
    %838 = vmatpush2.bf16.msra.mxu0 0
    %839 = vmatprep.mubr.bf16.mxu0 0
    %840 = vmatmul.mubr.bf16.gmra.mxu0 %v735
    %v841 = vpop.f32.mrf.mxu0
    %v842 = vadd.f32 %v757, %v841
    %v843 = vpop.f32.mrf.mxu0
    %v844 = vpop.f32.mrf.mxu0
    %v845 = vpop.f32.mrf.mxu0
    %846 = vdwg.mxu0
    %v847 = vtanh.pop %v842
    %vm848 = vcmask 64512
    %849 = vst.msk [vmem:[#allocation13] sm:$0xff] %vm848, %v847
    // Predicated region
    $region70: #{tpu_custom_call.1} parent=1 // pred_check
      _
    $region71: #{tpu_custom_call.1} parent=1 // pred_check_branch
      %851 = sbr.rel (0) target = $region73
    $region72: #{tpu_custom_call.1} parent=1 // pred_region
      %s853 = ssub.s32 128, 128
      %854 = vsyncadd [#allocation4], %s853
      %s856 = sshll.u32 [#allocation13], 4
      %s857 = int_to_ptr.vmem [resolvable:$true] %s856
      %859 = dma.vmem_to_hbm [thread:$0]  %s857, 128, %s11, [#allocation4]
    $region73: #{tpu_custom_call.1} parent=1 // pred_fallthru
      _
    // Predicated region
    $region74: #{tpu_custom_call.1} parent=1 // pred_check
      _
    $region75: #{tpu_custom_call.1} parent=1 // pred_check_branch
      %861 = sbr.rel (0) target = $region77
    $region76: #{tpu_custom_call.1} parent=1 // pred_region
      %862 = dma.done [#allocation4], 128
    $region77: #{tpu_custom_call.1} parent=1 // pred_fallthru
      _
    %863 = vsyncpa [#allocation3], 1
    %864 = vsyncpa [#allocation6], 1
    %865 = vsyncpa [#allocation9], 1
    %866 = vsyncpa [#allocation12], 1
    %867 = vsyncpa [#allocation4], 1

</llo_original>
